<compile_context>
chip_gen: v6e
topology: v6e:2x2x1
jax: 0.10.0
libtpu: 0.0.40
codegen_flags: <defaults>
</compile_context>

<pallas_src>
import jax
import jax.numpy as jnp
from jax.experimental import pallas as pl
from jax.experimental.pallas import tpu as pltpu

IMG_SHAPE = (1, 28, 28)
IN_DIM = IMG_SHAPE[0] * IMG_SHAPE[1] * IMG_SHAPE[2]   # 784
H1, H2, OUT = 512, 256, 1
TB_MAX = 1024                                         # batch tile upper bound


def _round_up(x, m):
    return ((x + m - 1) // m) * m


def _leaky_relu(x, slope=0.2):
    return jnp.where(x > 0, x, slope * x)


def discriminator_kernel(x_ref, w1_ref, b1_ref, w2_ref, b2_ref,
                         w3_ref, b3_ref, o_ref):
    # x: (tb, 784) f32; w1: (784, 512) bf16; w2: (512, 256) bf16
    # b1: (1, 512) f32; b2: (1, 256) f32; w3: (1, 256) f32; b3: (1, 1) f32
    # o: (1, 1, tb) f32
    x = x_ref[...].astype(jnp.bfloat16)                                  # cast on-chip

    h1 = jnp.dot(x, w1_ref[...], preferred_element_type=jnp.float32)    # (tb, 512) f32
    h1 = _leaky_relu(h1 + b1_ref[...])

    h2 = jnp.dot(h1.astype(jnp.bfloat16), w2_ref[...],
                 preferred_element_type=jnp.float32)                     # (tb, 256) f32
    h2 = _leaky_relu(h2 + b2_ref[...])

    # Final 256->1 layer: contract w3 (1,256) with h2 (tb,256) on their last
    # dims (A @ B.T) -> lane-dense (1, tb) logit row; negligible MXU work.
    logit = jax.lax.dot_general(
        w3_ref[...], h2, (((1,), (1,)), ((), ())),
        preferred_element_type=jnp.float32) + b3_ref[...]                # (1, tb)
    o_ref[...] = jax.nn.sigmoid(logit)[None].astype(o_ref.dtype)         # (1, 1, tb)


def discriminator_forward(img, params):
    """img: (B, 1, 28, 28) float32.  Returns validity: (B, 1) float32."""
    w1, b1, w2, b2, w3, b3 = params
    B = img.shape[0]

    # Batch tile: as large as possible (amortize per-step overhead), but keep
    # >= 2 grid steps when the batch allows so the "parallel" axis can shard
    # across both TensorCores on v7x.
    tb = min(TB_MAX, _round_up(B, 8))
    if _round_up(B, tb) // tb < 2 and tb >= 16:
        tb = _round_up((tb + 1) // 2, 8)
    b_pad = _round_up(B, tb)
    num_tiles = b_pad // tb

    # Flatten (matches torch .view); pad only the batch dim with zeros.
    # No K padding and no wrapper-side bf16 cast.
    x = img.reshape(B, IN_DIM).astype(jnp.float32)
    if b_pad != B:
        x = jnp.pad(x, ((0, b_pad - B), (0, 0)))

    # Weight packing: bf16 for MXU operands of layers 1-2, f32 elsewhere.
    w1b = w1.astype(jnp.bfloat16)                 # (784, 512)
    w2b = w2.astype(jnp.bfloat16)                 # (512, 256)
    w3r = w3.reshape(1, H2).astype(jnp.float32)   # (1, 256)
    b1f = b1.reshape(1, H1).astype(jnp.float32)
    b2f = b2.reshape(1, H2).astype(jnp.float32)
    b3f = b3.reshape(1, OUT).astype(jnp.float32)

    resident = lambda shape: pl.BlockSpec(shape, lambda i, _s=shape: (0,) * len(_s))

    out = pl.pallas_call(
        discriminator_kernel,
        out_shape=jax.ShapeDtypeStruct((num_tiles, 1, tb), jnp.float32),
        grid=(num_tiles,),
        in_specs=[
            pl.BlockSpec((tb, IN_DIM), lambda i: (i, 0)),   # x tile (pipelined)
            resident((IN_DIM, H1)),                         # W1 (fetched once, resident)
            resident((1, H1)),                              # b1
            resident((H1, H2)),                             # W2
            resident((1, H2)),                              # b2
            resident((1, H2)),                              # W3 row
            resident((1, OUT)),                             # b3
        ],
        out_specs=pl.BlockSpec((1, 1, tb), lambda i: (i, 0, 0)),
        compiler_params=pltpu.CompilerParams(
            dimension_semantics=("parallel",),
            vmem_limit_bytes=32 << 20,
        ),
    )(x, w1b, b1f, w2b, b2f, w3r, b3f)

    return out.reshape(b_pad, 1)[:B]


def init_params(key):
    """Deterministic synthetic parameters (same shapes as the nn.Linear layers)."""
    k1, k2, k3 = jax.random.split(key, 3)
    # Stored as (in, out); PyTorch keeps (out, in) and transposes in F.linear.
    w1 = jax.random.normal(k1, (IN_DIM, H1), jnp.float32) * 0.02
    b1 = jnp.zeros((1, H1), jnp.float32)
    w2 = jax.random.normal(k2, (H1, H2), jnp.float32) * 0.02
    b2 = jnp.zeros((1, H2), jnp.float32)
    w3 = jax.random.normal(k3, (H2, OUT), jnp.float32) * 0.02
    b3 = jnp.zeros((1, OUT), jnp.float32)
    return (w1, b1, w2, b2, w3, b3)


def _reference_forward(img, params):
    """Pure-f32 reference (matches the PyTorch module numerics)."""
    w1, b1, w2, b2, w3, b3 = params
    x = img.reshape(img.shape[0], -1).astype(jnp.float32)
    h1 = _leaky_relu(x @ w1 + b1)
    h2 = _leaky_relu(h1 @ w2 + b2)
    return jax.nn.sigmoid(h2 @ w3 + b3)


if __name__ == "__main__":
    key = jax.random.PRNGKey(0)
    kp, kx = jax.random.split(key)
    params = init_params(kp)

    B = 2
    img = jax.random.normal(kx, (B,) + IMG_SHAPE, jnp.float32)

    out = discriminator_forward(img, params)
    out = jax.block_until_ready(out)

    ref = _reference_forward(img, params)
    assert out.shape == (B, OUT), out.shape
    # bf16 matmul operands on layers 1-2 -> allow ~1e-2 deviation vs f32 ref.
    assert jnp.allclose(out, ref, atol=2e-2, rtol=2e-2), (out, ref)

    print("KERNEL_OK")
</pallas_src>

<mosaic_0001>
module attributes {stable_mosaic.version = 11 : i64} {
  func.func @discriminator_kernel(%arg0: i32, %arg1: memref<8x784xf32, #tpu.memory_space<vmem>>, %arg2: memref<784x512xbf16, #tpu.memory_space<vmem>>, %arg3: memref<1x512xf32, #tpu.memory_space<vmem>>, %arg4: memref<512x256xbf16, #tpu.memory_space<vmem>>, %arg5: memref<1x256xf32, #tpu.memory_space<vmem>>, %arg6: memref<1x256xf32, #tpu.memory_space<vmem>>, %arg7: memref<1x1xf32, #tpu.memory_space<vmem>>, %arg8: memref<1x1x8xf32, #tpu.memory_space<vmem>>) attributes {dimension_semantics = [#tpu.dimension_semantics<parallel>], iteration_bounds = array<i64: 1>, scalar_prefetch = 0 : i64, scratch_operands = 0 : i64, tpu.core_type = #tpu.core_type<tc>, window_params = [{transform_indices = @transform_0, window_bounds = array<i64: 8, 784>}, {pipeline_mode = #tpu.pipeline_mode<synchronous>, transform_indices = @transform_1, window_bounds = array<i64: 784, 512>}, {pipeline_mode = #tpu.pipeline_mode<synchronous>, transform_indices = @transform_2, window_bounds = array<i64: 1, 512>}, {pipeline_mode = #tpu.pipeline_mode<synchronous>, transform_indices = @transform_3, window_bounds = array<i64: 512, 256>}, {pipeline_mode = #tpu.pipeline_mode<synchronous>, transform_indices = @transform_4, window_bounds = array<i64: 1, 256>}, {pipeline_mode = #tpu.pipeline_mode<synchronous>, transform_indices = @transform_5, window_bounds = array<i64: 1, 256>}, {pipeline_mode = #tpu.pipeline_mode<synchronous>, transform_indices = @transform_6, window_bounds = array<i64: 1, 1>}, {transform_indices = @transform_7, window_bounds = array<i64: 1, 1, 8>}]} {
    %c0 = arith.constant 0 : index
    %c0_0 = arith.constant 0 : index
    %0 = vector.load %arg1[%c0, %c0_0] : memref<8x784xf32, #tpu.memory_space<vmem>>, vector<8x784xf32>
    %1 = arith.truncf %0 : vector<8x784xf32> to vector<8x784xbf16>
    %c0_1 = arith.constant 0 : index
    %c0_2 = arith.constant 0 : index
    %2 = vector.load %arg2[%c0_1, %c0_2] : memref<784x512xbf16, #tpu.memory_space<vmem>>, vector<784x512xbf16>
    %cst = arith.constant dense<0.000000e+00> : vector<8x512xf32>
    %3 = tpu.matmul %1, %2, %cst {dimension_numbers = #tpu.dot_dimension_numbers<[1], [0], [0], [1], [0, 0, 1, 1], [], []>} : vector<8x784xbf16>, vector<784x512xbf16>, vector<8x512xf32> -> vector<8x512xf32>
    %c0_3 = arith.constant 0 : index
    %c0_4 = arith.constant 0 : index
    %4 = vector.load %arg3[%c0_3, %c0_4] : memref<1x512xf32, #tpu.memory_space<vmem>>, vector<1x512xf32>
    %5 = vector.broadcast %4 : vector<1x512xf32> to vector<8x512xf32>
    %6 = arith.addf %3, %5 : vector<8x512xf32>
    %cst_5 = arith.constant 0.000000e+00 : f32
    %7 = vector.broadcast %cst_5 : f32 to vector<8x512xf32>
    %8 = arith.cmpf ogt, %6, %7 : vector<8x512xf32>
    %cst_6 = arith.constant 2.000000e-01 : f32
    %9 = vector.broadcast %cst_6 : f32 to vector<8x512xf32>
    %10 = arith.mulf %9, %6 : vector<8x512xf32>
    %11 = arith.select %8, %6, %10 : vector<8x512xi1>, vector<8x512xf32>
    %12 = arith.truncf %11 : vector<8x512xf32> to vector<8x512xbf16>
    %c0_7 = arith.constant 0 : index
    %c0_8 = arith.constant 0 : index
    %13 = vector.load %arg4[%c0_7, %c0_8] : memref<512x256xbf16, #tpu.memory_space<vmem>>, vector<512x256xbf16>
    %cst_9 = arith.constant dense<0.000000e+00> : vector<8x256xf32>
    %14 = tpu.matmul %12, %13, %cst_9 {dimension_numbers = #tpu.dot_dimension_numbers<[1], [0], [0], [1], [0, 0, 1, 1], [], []>} : vector<8x512xbf16>, vector<512x256xbf16>, vector<8x256xf32> -> vector<8x256xf32>
    %c0_10 = arith.constant 0 : index
    %c0_11 = arith.constant 0 : index
    %15 = vector.load %arg5[%c0_10, %c0_11] : memref<1x256xf32, #tpu.memory_space<vmem>>, vector<1x256xf32>
    %16 = vector.broadcast %15 : vector<1x256xf32> to vector<8x256xf32>
    %17 = arith.addf %14, %16 : vector<8x256xf32>
    %cst_12 = arith.constant 0.000000e+00 : f32
    %18 = vector.broadcast %cst_12 : f32 to vector<8x256xf32>
    %19 = arith.cmpf ogt, %17, %18 : vector<8x256xf32>
    %cst_13 = arith.constant 2.000000e-01 : f32
    %20 = vector.broadcast %cst_13 : f32 to vector<8x256xf32>
    %21 = arith.mulf %20, %17 : vector<8x256xf32>
    %22 = arith.select %19, %17, %21 : vector<8x256xi1>, vector<8x256xf32>
    %c0_14 = arith.constant 0 : index
    %c0_15 = arith.constant 0 : index
    %23 = vector.load %arg6[%c0_14, %c0_15] : memref<1x256xf32, #tpu.memory_space<vmem>>, vector<1x256xf32>
    %cst_16 = arith.constant dense<0.000000e+00> : vector<1x8xf32>
    %24 = tpu.matmul %23, %22, %cst_16 {dimension_numbers = #tpu.dot_dimension_numbers<[1], [1], [0], [0], [0, 0, 1, 0], [], []>} : vector<1x256xf32>, vector<8x256xf32>, vector<1x8xf32> -> vector<1x8xf32>
    %c0_17 = arith.constant 0 : index
    %c0_18 = arith.constant 0 : index
    %25 = vector.load %arg7[%c0_17, %c0_18] : memref<1x1xf32, #tpu.memory_space<vmem>>, vector<1x1xf32>
    %26 = vector.broadcast %25 : vector<1x1xf32> to vector<1x8xf32>
    %27 = arith.addf %24, %26 : vector<1x8xf32>
    %28 = arith.negf %27 : vector<1x8xf32>
    %29 = math.exp %28 : vector<1x8xf32>
    %cst_19 = arith.constant 1.000000e+00 : f32
    %30 = vector.broadcast %cst_19 : f32 to vector<1x8xf32>
    %31 = arith.addf %30, %29 : vector<1x8xf32>
    %32 = arith.divf %30, %31 : vector<1x8xf32>
    %33 = vector.shape_cast %32 : vector<1x8xf32> to vector<1x1x8xf32>
    %c0_20 = arith.constant 0 : index
    %c0_21 = arith.constant 0 : index
    %c0_22 = arith.constant 0 : index
    %34 = vector.load %arg8[%c0_20, %c0_21, %c0_22] : memref<1x1x8xf32, #tpu.memory_space<vmem>>, vector<1x1x8xf32>
    tpu.vector_store %arg8[%c0_20, %c0_21, %c0_22], %33 {strides = array<i32>} : memref<1x1x8xf32, #tpu.memory_space<vmem>>, vector<1x1x8xf32>,
    return
  }
  func.func @transform_0(%arg0: i32) -> (i32, i32) {
    %c0_i32 = arith.constant 0 : i32
    %c0_i32_0 = arith.constant 0 : i32
    return %arg0, %c0_i32 : i32, i32
  }
  func.func @transform_1(%arg0: i32) -> (i32, i32) {
    %c0_i32 = arith.constant 0 : i32
    %c0_i32_0 = arith.constant 0 : i32
    %c0_i32_1 = arith.constant 0 : i32
    return %c0_i32, %c0_i32_0 : i32, i32
  }
  func.func @transform_2(%arg0: i32) -> (i32, i32) {
    %c0_i32 = arith.constant 0 : i32
    %c0_i32_0 = arith.constant 0 : i32
    %c0_i32_1 = arith.constant 0 : i32
    return %c0_i32, %c0_i32_0 : i32, i32
  }
  func.func @transform_3(%arg0: i32) -> (i32, i32) {
    %c0_i32 = arith.constant 0 : i32
    %c0_i32_0 = arith.constant 0 : i32
    %c0_i32_1 = arith.constant 0 : i32
    return %c0_i32, %c0_i32_0 : i32, i32
  }
  func.func @transform_4(%arg0: i32) -> (i32, i32) {
    %c0_i32 = arith.constant 0 : i32
    %c0_i32_0 = arith.constant 0 : i32
    %c0_i32_1 = arith.constant 0 : i32
    return %c0_i32, %c0_i32_0 : i32, i32
  }
  func.func @transform_5(%arg0: i32) -> (i32, i32) {
    %c0_i32 = arith.constant 0 : i32
    %c0_i32_0 = arith.constant 0 : i32
    %c0_i32_1 = arith.constant 0 : i32
    return %c0_i32, %c0_i32_0 : i32, i32
  }
  func.func @transform_6(%arg0: i32) -> (i32, i32) {
    %c0_i32 = arith.constant 0 : i32
    %c0_i32_0 = arith.constant 0 : i32
    %c0_i32_1 = arith.constant 0 : i32
    return %c0_i32, %c0_i32_0 : i32, i32
  }
  func.func @transform_7(%arg0: i32) -> (i32, i32, i32) {
    %c0_i32 = arith.constant 0 : i32
    %c0_i32_0 = arith.constant 0 : i32
    %c0_i32_1 = arith.constant 0 : i32
    return %arg0, %c0_i32, %c0_i32_0 : i32, i32, i32
  }
}

</mosaic_0001>

<llo_original>
// kernel: tpu_custom_call.1
$region0: #{tpu_custom_call.1}
  #allocation0 [shape = 'u32[]', space=smem, size = 0x4, offset = 0x4, fixed_abs, tag = 'smem constant byte address 0x4 - core index']
  #allocation1 [shape = 'u32[144,128]{1,0:T(1,128)}', space=vmem, size = 0x12000, scoped, tag = 'internal scratch']
  #allocation2 [shape = 'f32[1,1]{1,0:T(1,128)S(1)}', space=vmem, size = 0x200, scoped, tag = 'scoped memory for tpu_custom_call.1']
  %s0 = inlined_call_operand.hbm [shape: f32[8,784], index: 0, kind: input, shape index: {}]
  %s1 = inlined_call_operand.hbm [shape: bf16[784,512], index: 1, kind: input, shape index: {}]
  %s2 = inlined_call_operand.vmem [shape: f32[1,512], index: 2, kind: input, shape index: {}]
  %s3 = inlined_call_operand.hbm [shape: bf16[512,256], index: 3, kind: input, shape index: {}]
  %s4 = inlined_call_operand.vmem [shape: f32[1,256], index: 4, kind: input, shape index: {}]
  %s5 = inlined_call_operand.vmem [shape: f32[1,256], index: 5, kind: input, shape index: {}]
  %s6 = inlined_call_operand.<no memory space> [shape: f32[1,1], index: 6, kind: input, shape index: {}]
  %s7 = inlined_call_operand.hbm [shape: f32[1,1,8], index: 7, kind: output, shape index: {}]
  %s8 = sld [smem:[#allocation0]]
  $region50: #{tpu_custom_call.1} parent=0
    _
  %s10 = ssub.s32 1, %s8
  %s11 = scalar_select 0, %s10, %s8
  %v12 = vstv %s6
  %13 = vst [vmem:[#allocation2] sm:$0x1] %v12
  $region1: #{tpu_custom_call.1} parent=0
    #allocation3 [shape = 'u8[28672]{0}', space=vmem, size = 0x7000, scoped, tag = 'input window, operand 0, single buffered']
    #allocation4 [shape = 's32[1]{0}', space=sflag, size = 0x4, scoped, tag = 'scoped memory for tpu_custom_call.1']
    #allocation5 [shape = 's32[1]{0}', space=sflag, size = 0x4, scoped, tag = 'scoped memory for tpu_custom_call.1']
    #allocation6 [shape = 'u8[802816]{0}', space=vmem, size = 0xc4000, scoped, tag = 'input window, operand 1, single buffered']
    #allocation7 [shape = 's32[1]{0}', space=sflag, size = 0x4, scoped, tag = 'scoped memory for tpu_custom_call.1']
    #allocation8 [shape = 'u8[262144]{0}', space=vmem, size = 0x40000, scoped, tag = 'input window, operand 3, single buffered']
    #allocation9 [shape = 'u8[512]{0}', space=vmem, size = 0x400, scoped, tag = 'output window, operand 0, single buffered']
    %14 = vsyncpa [#allocation4], 0
    %15 = vsyncpa [#allocation7], 0
    %16 = vsyncpa [#allocation5], 0
    // Predicated region
    $region2: #{tpu_custom_call.1} parent=1 // pred_check
      _
    $region3: #{tpu_custom_call.1} parent=1 // pred_check_branch
      %18 = sbr.rel (0) target = $region5
    $region4: #{tpu_custom_call.1} parent=1 // pred_region
      %s20 = ssub.s32 896, 896
      %21 = vsyncadd [#allocation4], %s20
      %s23 = sshll.u32 [#allocation3], 4
      %s24 = int_to_ptr.vmem [resolvable:$true] %s23
      %26 = dma.hbm_to_vmem [thread:$0]  %s0, 896, %s24, [#allocation4]
    $region5: #{tpu_custom_call.1} parent=1 // pred_fallthru
      _
    // Predicated region
    $region6: #{tpu_custom_call.1} parent=1 // pred_check
      _
    $region7: #{tpu_custom_call.1} parent=1 // pred_check_branch
      %28 = sbr.rel (0) target = $region9
    $region8: #{tpu_custom_call.1} parent=1 // pred_region
      %s30 = ssub.s32 25088, 25088
      %31 = vsyncadd [#allocation7], %s30
      %s32 = sshll.u32 [#allocation6], 4
      %s33 = int_to_ptr.vmem [resolvable:$true] %s32
      %38 = dma.hbm_to_vmem [thread:$0]  %s1, 25088, %s33, [#allocation7], 256, 256, 16
    $region9: #{tpu_custom_call.1} parent=1 // pred_fallthru
      _
    // Predicated region
    $region10: #{tpu_custom_call.1} parent=1 // pred_check
      _
    $region11: #{tpu_custom_call.1} parent=1 // pred_check_branch
      %40 = sbr.rel (0) target = $region13
    $region12: #{tpu_custom_call.1} parent=1 // pred_region
      _
    $region13: #{tpu_custom_call.1} parent=1 // pred_fallthru
      _
    // Predicated region
    $region14: #{tpu_custom_call.1} parent=1 // pred_check
      _
    $region15: #{tpu_custom_call.1} parent=1 // pred_check_branch
      %42 = sbr.rel (0) target = $region17
    $region16: #{tpu_custom_call.1} parent=1 // pred_region
      %s44 = ssub.s32 8192, 8192
      %45 = vsyncadd [#allocation7], %s44
      %s46 = sshll.u32 [#allocation8], 4
      %s47 = int_to_ptr.vmem [resolvable:$true] %s46
      %52 = dma.hbm_to_vmem [thread:$0]  %s3, 8192, %s47, [#allocation7], 128, 128, 8
    $region17: #{tpu_custom_call.1} parent=1 // pred_fallthru
      _
    // Predicated region
    $region18: #{tpu_custom_call.1} parent=1 // pred_check
      _
    $region19: #{tpu_custom_call.1} parent=1 // pred_check_branch
      %54 = sbr.rel (0) target = $region21
    $region20: #{tpu_custom_call.1} parent=1 // pred_region
      _
    $region21: #{tpu_custom_call.1} parent=1 // pred_fallthru
      _
    // Predicated region
    $region22: #{tpu_custom_call.1} parent=1 // pred_check
      _
    $region23: #{tpu_custom_call.1} parent=1 // pred_check_branch
      %56 = sbr.rel (0) target = $region25
    $region24: #{tpu_custom_call.1} parent=1 // pred_region
      _
    $region25: #{tpu_custom_call.1} parent=1 // pred_fallthru
      _
    // Predicated region
    $region26: #{tpu_custom_call.1} parent=1 // pred_check
      _
    $region27: #{tpu_custom_call.1} parent=1 // pred_check_branch
      %58 = sbr.rel (0) target = $region29
    $region28: #{tpu_custom_call.1} parent=1 // pred_region
      _
    $region29: #{tpu_custom_call.1} parent=1 // pred_fallthru
      _
    // Predicated region
    $region30: #{tpu_custom_call.1} parent=1 // pred_check
      _
    $region31: #{tpu_custom_call.1} parent=1 // pred_check_branch
      %60 = sbr.rel (0) target = $region33
    $region32: #{tpu_custom_call.1} parent=1 // pred_region
      %61 = dma.done [#allocation4], 896
    $region33: #{tpu_custom_call.1} parent=1 // pred_fallthru
      _
    // Predicated region
    $region34: #{tpu_custom_call.1} parent=1 // pred_check
      _
    $region35: #{tpu_custom_call.1} parent=1 // pred_check_branch
      %63 = sbr.rel (0) target = $region37
    $region36: #{tpu_custom_call.1} parent=1 // pred_region
      %64 = dma.done [#allocation7], 25088
    $region37: #{tpu_custom_call.1} parent=1 // pred_fallthru
      _
    // Predicated region
    $region38: #{tpu_custom_call.1} parent=1 // pred_check
      _
    $region39: #{tpu_custom_call.1} parent=1 // pred_check_branch
      %66 = sbr.rel (0) target = $region41
    $region40: #{tpu_custom_call.1} parent=1 // pred_region
      %67 = dma.done [#allocation7], 8192
    $region41: #{tpu_custom_call.1} parent=1 // pred_fallthru
      _
    %v69 = vld [vmem:[#allocation3] sm:$0xff]
    %v70 = vld [vmem:[#allocation3 + $0x8] sm:$0xff]
    %v71 = vld [vmem:[#allocation3 + $0x10] sm:$0xff]
    %v72 = vld [vmem:[#allocation3 + $0x18] sm:$0xff]
    %v73 = vld [vmem:[#allocation3 + $0x20] sm:$0xff]
    %v74 = vld [vmem:[#allocation3 + $0x28] sm:$0xff]
    %v75 = vld [vmem:[#allocation3 + $0x30] sm:$0xff]
    %v76 = vpack.c.bf16 %v69, %v69
    %v77 = vpack.c.bf16 %v70, %v70
    %v78 = vpack.c.bf16 %v71, %v71
    %v79 = vpack.c.bf16 %v72, %v72
    %v80 = vpack.c.bf16 %v73, %v73
    %v81 = vpack.c.bf16 %v74, %v74
    %v82 = vpack.c.bf16 %v75, %v75
    %v83 = vld [vmem:[#allocation6] sm:$0xff]
    %v84 = vld [vmem:[#allocation6 + $0x8] sm:$0xff]
    %v85 = vld [vmem:[#allocation6 + $0x10] sm:$0xff]
    %v86 = vld [vmem:[#allocation6 + $0x18] sm:$0xff]
    %v87 = vld [vmem:[#allocation6 + $0x20] sm:$0xff]
    %v88 = vld [vmem:[#allocation6 + $0x28] sm:$0xff]
    %v89 = vld [vmem:[#allocation6 + $0x30] sm:$0xff]
    %v90 = vld [vmem:[#allocation6 + $0x38] sm:$0xff]
    %v91 = vld [vmem:[#allocation6 + $0x40] sm:$0xff]
    %v92 = vld [vmem:[#allocation6 + $0x48] sm:$0xff]
    %v93 = vld [vmem:[#allocation6 + $0x50] sm:$0xff]
    %v94 = vld [vmem:[#allocation6 + $0x58] sm:$0xff]
    %v95 = vld [vmem:[#allocation6 + $0x60] sm:$0xff]
    %v96 = vld [vmem:[#allocation6 + $0x68] sm:$0xff]
    %v97 = vld [vmem:[#allocation6 + $0x70] sm:$0xff]
    %v98 = vld [vmem:[#allocation6 + $0x78] sm:$0xff]
    %v99 = vld [vmem:[#allocation6 + $0x80] sm:$0xff]
    %v100 = vld [vmem:[#allocation6 + $0x88] sm:$0xff]
    %v101 = vld [vmem:[#allocation6 + $0x90] sm:$0xff]
    %v102 = vld [vmem:[#allocation6 + $0x98] sm:$0xff]
    %v103 = vld [vmem:[#allocation6 + $0xa0] sm:$0xff]
    %v104 = vld [vmem:[#allocation6 + $0xa8] sm:$0xff]
    %v105 = vld [vmem:[#allocation6 + $0xb0] sm:$0xff]
    %v106 = vld [vmem:[#allocation6 + $0xb8] sm:$0xff]
    %v107 = vld [vmem:[#allocation6 + $0xc0] sm:$0xff]
    %v108 = vld [vmem:[#allocation6 + $0xc8] sm:$0xff]
    %v109 = vld [vmem:[#allocation6 + $0xd0] sm:$0xff]
    %v110 = vld [vmem:[#allocation6 + $0xd8] sm:$0xff]
    %v111 = vld [vmem:[#allocation6 + $0xe0] sm:$0xff]
    %v112 = vld [vmem:[#allocation6 + $0xe8] sm:$0xff]
    %v113 = vld [vmem:[#allocation6 + $0xf0] sm:$0xff]
    %v114 = vld [vmem:[#allocation6 + $0xf8] sm:$0xff]
    %v115 = vld [vmem:[#allocation6 + $0x100] sm:$0xff]
    %v116 = vld [vmem:[#allocation6 + $0x108] sm:$0xff]
    %v117 = vld [vmem:[#allocation6 + $0x110] sm:$0xff]
    %v118 = vld [vmem:[#allocation6 + $0x118] sm:$0xff]
    %v119 = vld [vmem:[#allocation6 + $0x120] sm:$0xff]
    %v120 = vld [vmem:[#allocation6 + $0x128] sm:$0xff]
    %v121 = vld [vmem:[#allocation6 + $0x130] sm:$0xff]
    %v122 = vld [vmem:[#allocation6 + $0x138] sm:$0xff]
    %v123 = vld [vmem:[#allocation6 + $0x140] sm:$0xff]
    %v124 = vld [vmem:[#allocation6 + $0x148] sm:$0xff]
    %v125 = vld [vmem:[#allocation6 + $0x150] sm:$0xff]
    %v126 = vld [vmem:[#allocation6 + $0x158] sm:$0xff]
    %v127 = vld [vmem:[#allocation6 + $0x160] sm:$0xff]
    %v128 = vld [vmem:[#allocation6 + $0x168] sm:$0xff]
    %v129 = vld [vmem:[#allocation6 + $0x170] sm:$0xff]
    %v130 = vld [vmem:[#allocation6 + $0x178] sm:$0xff]
    %v131 = vld [vmem:[#allocation6 + $0x180] sm:$0xff]
    %v132 = vld [vmem:[#allocation6 + $0x188] sm:$0xff]
    %v133 = vld [vmem:[#allocation6 + $0x190] sm:$0xff]
    %v134 = vld [vmem:[#allocation6 + $0x198] sm:$0xff]
    %v135 = vld [vmem:[#allocation6 + $0x1a0] sm:$0xff]
    %v136 = vld [vmem:[#allocation6 + $0x1a8] sm:$0xff]
    %v137 = vld [vmem:[#allocation6 + $0x1b0] sm:$0xff]
    %v138 = vld [vmem:[#allocation6 + $0x1b8] sm:$0xff]
    %v139 = vld [vmem:[#allocation6 + $0x1c0] sm:$0xff]
    %v140 = vld [vmem:[#allocation6 + $0x1c8] sm:$0xff]
    %v141 = vld [vmem:[#allocation6 + $0x1d0] sm:$0xff]
    %v142 = vld [vmem:[#allocation6 + $0x1d8] sm:$0xff]
    %v143 = vld [vmem:[#allocation6 + $0x1e0] sm:$0xff]
    %v144 = vld [vmem:[#allocation6 + $0x1e8] sm:$0xff]
    %v145 = vld [vmem:[#allocation6 + $0x1f0] sm:$0xff]
    %v146 = vld [vmem:[#allocation6 + $0x1f8] sm:$0xff]
    %v147 = vld [vmem:[#allocation6 + $0x200] sm:$0xff]
    %v148 = vld [vmem:[#allocation6 + $0x208] sm:$0xff]
    %v149 = vld [vmem:[#allocation6 + $0x210] sm:$0xff]
    %v150 = vld [vmem:[#allocation6 + $0x218] sm:$0xff]
    %v151 = vld [vmem:[#allocation6 + $0x220] sm:$0xff]
    %v152 = vld [vmem:[#allocation6 + $0x228] sm:$0xff]
    %v153 = vld [vmem:[#allocation6 + $0x230] sm:$0xff]
    %v154 = vld [vmem:[#allocation6 + $0x238] sm:$0xff]
    %v155 = vld [vmem:[#allocation6 + $0x240] sm:$0xff]
    %v156 = vld [vmem:[#allocation6 + $0x248] sm:$0xff]
    %v157 = vld [vmem:[#allocation6 + $0x250] sm:$0xff]
    %v158 = vld [vmem:[#allocation6 + $0x258] sm:$0xff]
    %v159 = vld [vmem:[#allocation6 + $0x260] sm:$0xff]
    %v160 = vld [vmem:[#allocation6 + $0x268] sm:$0xff]
    %v161 = vld [vmem:[#allocation6 + $0x270] sm:$0xff]
    %v162 = vld [vmem:[#allocation6 + $0x278] sm:$0xff]
    %v163 = vld [vmem:[#allocation6 + $0x280] sm:$0xff]
    %v164 = vld [vmem:[#allocation6 + $0x288] sm:$0xff]
    %v165 = vld [vmem:[#allocation6 + $0x290] sm:$0xff]
    %v166 = vld [vmem:[#allocation6 + $0x298] sm:$0xff]
    %v167 = vld [vmem:[#allocation6 + $0x2a0] sm:$0xff]
    %v168 = vld [vmem:[#allocation6 + $0x2a8] sm:$0xff]
    %v169 = vld [vmem:[#allocation6 + $0x2b0] sm:$0xff]
    %v170 = vld [vmem:[#allocation6 + $0x2b8] sm:$0xff]
    %v171 = vld [vmem:[#allocation6 + $0x2c0] sm:$0xff]
    %v172 = vld [vmem:[#allocation6 + $0x2c8] sm:$0xff]
    %v173 = vld [vmem:[#allocation6 + $0x2d0] sm:$0xff]
    %v174 = vld [vmem:[#allocation6 + $0x2d8] sm:$0xff]
    %v175 = vld [vmem:[#allocation6 + $0x2e0] sm:$0xff]
    %v176 = vld [vmem:[#allocation6 + $0x2e8] sm:$0xff]
    %v177 = vld [vmem:[#allocation6 + $0x2f0] sm:$0xff]
    %v178 = vld [vmem:[#allocation6 + $0x2f8] sm:$0xff]
    %v179 = vld [vmem:[#allocation6 + $0x300] sm:$0xff]
    %v180 = vld [vmem:[#allocation6 + $0x308] sm:$0xff]
    %v181 = vld [vmem:[#allocation6 + $0x310] sm:$0xff]
    %v182 = vld [vmem:[#allocation6 + $0x318] sm:$0xff]
    %v183 = vld [vmem:[#allocation6 + $0x320] sm:$0xff]
    %v184 = vld [vmem:[#allocation6 + $0x328] sm:$0xff]
    %v185 = vld [vmem:[#allocation6 + $0x330] sm:$0xff]
    %v186 = vld [vmem:[#allocation6 + $0x338] sm:$0xff]
    %v187 = vld [vmem:[#allocation6 + $0x340] sm:$0xff]
    %v188 = vld [vmem:[#allocation6 + $0x348] sm:$0xff]
    %v189 = vld [vmem:[#allocation6 + $0x350] sm:$0xff]
    %v190 = vld [vmem:[#allocation6 + $0x358] sm:$0xff]
    %v191 = vld [vmem:[#allocation6 + $0x360] sm:$0xff]
    %v192 = vld [vmem:[#allocation6 + $0x368] sm:$0xff]
    %v193 = vld [vmem:[#allocation6 + $0x370] sm:$0xff]
    %v194 = vld [vmem:[#allocation6 + $0x378] sm:$0xff]
    %v195 = vld [vmem:[#allocation6 + $0x380] sm:$0xff]
    %v196 = vld [vmem:[#allocation6 + $0x388] sm:$0xff]
    %v197 = vld [vmem:[#allocation6 + $0x390] sm:$0xff]
    %v198 = vld [vmem:[#allocation6 + $0x398] sm:$0xff]
    %v199 = vld [vmem:[#allocation6 + $0x3a0] sm:$0xff]
    %v200 = vld [vmem:[#allocation6 + $0x3a8] sm:$0xff]
    %v201 = vld [vmem:[#allocation6 + $0x3b0] sm:$0xff]
    %v202 = vld [vmem:[#allocation6 + $0x3b8] sm:$0xff]
    %v203 = vld [vmem:[#allocation6 + $0x3c0] sm:$0xff]
    %v204 = vld [vmem:[#allocation6 + $0x3c8] sm:$0xff]
    %v205 = vld [vmem:[#allocation6 + $0x3d0] sm:$0xff]
    %v206 = vld [vmem:[#allocation6 + $0x3d8] sm:$0xff]
    %v207 = vld [vmem:[#allocation6 + $0x3e0] sm:$0xff]
    %v208 = vld [vmem:[#allocation6 + $0x3e8] sm:$0xff]
    %v209 = vld [vmem:[#allocation6 + $0x3f0] sm:$0xff]
    %v210 = vld [vmem:[#allocation6 + $0x3f8] sm:$0xff]
    %v211 = vld [vmem:[#allocation6 + $0x400] sm:$0xff]
    %v212 = vld [vmem:[#allocation6 + $0x408] sm:$0xff]
    %v213 = vld [vmem:[#allocation6 + $0x410] sm:$0xff]
    %v214 = vld [vmem:[#allocation6 + $0x418] sm:$0xff]
    %v215 = vld [vmem:[#allocation6 + $0x420] sm:$0xff]
    %v216 = vld [vmem:[#allocation6 + $0x428] sm:$0xff]
    %v217 = vld [vmem:[#allocation6 + $0x430] sm:$0xff]
    %v218 = vld [vmem:[#allocation6 + $0x438] sm:$0xff]
    %v219 = vld [vmem:[#allocation6 + $0x440] sm:$0xff]
    %v220 = vld [vmem:[#allocation6 + $0x448] sm:$0xff]
    %v221 = vld [vmem:[#allocation6 + $0x450] sm:$0xff]
    %v222 = vld [vmem:[#allocation6 + $0x458] sm:$0xff]
    %v223 = vld [vmem:[#allocation6 + $0x460] sm:$0xff]
    %v224 = vld [vmem:[#allocation6 + $0x468] sm:$0xff]
    %v225 = vld [vmem:[#allocation6 + $0x470] sm:$0xff]
    %v226 = vld [vmem:[#allocation6 + $0x478] sm:$0xff]
    %v227 = vld [vmem:[#allocation6 + $0x480] sm:$0xff]
    %v228 = vld [vmem:[#allocation6 + $0x488] sm:$0xff]
    %v229 = vld [vmem:[#allocation6 + $0x490] sm:$0xff]
    %v230 = vld [vmem:[#allocation6 + $0x498] sm:$0xff]
    %v231 = vld [vmem:[#allocation6 + $0x4a0] sm:$0xff]
    %v232 = vld [vmem:[#allocation6 + $0x4a8] sm:$0xff]
    %v233 = vld [vmem:[#allocation6 + $0x4b0] sm:$0xff]
    %v234 = vld [vmem:[#allocation6 + $0x4b8] sm:$0xff]
    %v235 = vld [vmem:[#allocation6 + $0x4c0] sm:$0xff]
    %v236 = vld [vmem:[#allocation6 + $0x4c8] sm:$0xff]
    %v237 = vld [vmem:[#allocation6 + $0x4d0] sm:$0xff]
    %v238 = vld [vmem:[#allocation6 + $0x4d8] sm:$0xff]
    %v239 = vld [vmem:[#allocation6 + $0x4e0] sm:$0xff]
    %v240 = vld [vmem:[#allocation6 + $0x4e8] sm:$0xff]
    %v241 = vld [vmem:[#allocation6 + $0x4f0] sm:$0xff]
    %v242 = vld [vmem:[#allocation6 + $0x4f8] sm:$0xff]
    %v243 = vld [vmem:[#allocation6 + $0x500] sm:$0xff]
    %v244 = vld [vmem:[#allocation6 + $0x508] sm:$0xff]
    %v245 = vld [vmem:[#allocation6 + $0x510] sm:$0xff]
    %v246 = vld [vmem:[#allocation6 + $0x518] sm:$0xff]
    %v247 = vld [vmem:[#allocation6 + $0x520] sm:$0xff]
    %v248 = vld [vmem:[#allocation6 + $0x528] sm:$0xff]
    %v249 = vld [vmem:[#allocation6 + $0x530] sm:$0xff]
    %v250 = vld [vmem:[#allocation6 + $0x538] sm:$0xff]
    %v251 = vld [vmem:[#allocation6 + $0x540] sm:$0xff]
    %v252 = vld [vmem:[#allocation6 + $0x548] sm:$0xff]
    %v253 = vld [vmem:[#allocation6 + $0x550] sm:$0xff]
    %v254 = vld [vmem:[#allocation6 + $0x558] sm:$0xff]
    %v255 = vld [vmem:[#allocation6 + $0x560] sm:$0xff]
    %v256 = vld [vmem:[#allocation6 + $0x568] sm:$0xff]
    %v257 = vld [vmem:[#allocation6 + $0x570] sm:$0xff]
    %v258 = vld [vmem:[#allocation6 + $0x578] sm:$0xff]
    %v259 = vld [vmem:[#allocation6 + $0x580] sm:$0xff]
    %v260 = vld [vmem:[#allocation6 + $0x588] sm:$0xff]
    %v261 = vld [vmem:[#allocation6 + $0x590] sm:$0xff]
    %v262 = vld [vmem:[#allocation6 + $0x598] sm:$0xff]
    %v263 = vld [vmem:[#allocation6 + $0x5a0] sm:$0xff]
    %v264 = vld [vmem:[#allocation6 + $0x5a8] sm:$0xff]
    %v265 = vld [vmem:[#allocation6 + $0x5b0] sm:$0xff]
    %v266 = vld [vmem:[#allocation6 + $0x5b8] sm:$0xff]
    %v267 = vld [vmem:[#allocation6 + $0x5c0] sm:$0xff]
    %v268 = vld [vmem:[#allocation6 + $0x5c8] sm:$0xff]
    %v269 = vld [vmem:[#allocation6 + $0x5d0] sm:$0xff]
    %v270 = vld [vmem:[#allocation6 + $0x5d8] sm:$0xff]
    %v271 = vld [vmem:[#allocation6 + $0x5e0] sm:$0xff]
    %v272 = vld [vmem:[#allocation6 + $0x5e8] sm:$0xff]
    %v273 = vld [vmem:[#allocation6 + $0x5f0] sm:$0xff]
    %v274 = vld [vmem:[#allocation6 + $0x5f8] sm:$0xff]
    %v275 = vld [vmem:[#allocation6 + $0x600] sm:$0xff]
    %v276 = vld [vmem:[#allocation6 + $0x608] sm:$0xff]
    %v277 = vld [vmem:[#allocation6 + $0x610] sm:$0xff]
    %v278 = vld [vmem:[#allocation6 + $0x618] sm:$0xff]
    %v279 = vld [vmem:[%s2] sm:$0xf]
    %v281 = vlaneseq
    %v282 = vshrl.u32 %v281, 7
    %v283 = vsub.s32 0, %v282
    %v284 = vrot.slane %v279, %v283
    %v285 = vlaneseq
    %v286 = vshrl.u32 %v285, 7
    %v287 = vsub.s32 1, %v286
    %v288 = vrot.slane %v279, %v287
    %v289 = vlaneseq
    %v290 = vshrl.u32 %v289, 7
    %v291 = vsub.s32 2, %v290
    %v292 = vrot.slane %v279, %v291
    %v293 = vlaneseq
    %v294 = vshrl.u32 %v293, 7
    %v295 = vsub.s32 3, %v294
    %v296 = vrot.slane %v279, %v295
    %v497 = vunpack.c.l.b16 %v83
    %v498 = vunpack.c.h.b16 %v83
    %v499 = vunpack.c.l.b16 %v84
    %v500 = vunpack.c.h.b16 %v84
    %v501 = vunpack.c.l.b16 %v85
    %v502 = vunpack.c.h.b16 %v85
    %v503 = vunpack.c.l.b16 %v86
    %v504 = vunpack.c.h.b16 %v86
    %v505 = vunpack.c.l.b16 %v87
    %v506 = vunpack.c.h.b16 %v87
    %v507 = vunpack.c.l.b16 %v88
    %v508 = vunpack.c.h.b16 %v88
    %v509 = vunpack.c.l.b16 %v89
    %v510 = vunpack.c.h.b16 %v89
    %v511 = vunpack.c.l.b16 %v90
    %v512 = vunpack.c.h.b16 %v90
    %v513 = vunpack.c.l.b16 %v91
    %v514 = vunpack.c.h.b16 %v91
    %v515 = vunpack.c.l.b16 %v92
    %v516 = vunpack.c.h.b16 %v92
    %v517 = vunpack.c.l.b16 %v93
    %v518 = vunpack.c.h.b16 %v93
    %v519 = vunpack.c.l.b16 %v94
    %v520 = vunpack.c.h.b16 %v94
    %v521 = vunpack.c.l.b16 %v95
    %v522 = vunpack.c.h.b16 %v95
    %v523 = vunpack.c.l.b16 %v96
    %v524 = vunpack.c.h.b16 %v96
    %v525 = vunpack.c.l.b16 %v97
    %v526 = vunpack.c.h.b16 %v97
    %v527 = vunpack.c.l.b16 %v98
    %v528 = vunpack.c.h.b16 %v98
    %v529 = vunpack.c.l.b16 %v99
    %v530 = vunpack.c.h.b16 %v99
    %v531 = vunpack.c.l.b16 %v100
    %v532 = vunpack.c.h.b16 %v100
    %v533 = vunpack.c.l.b16 %v101
    %v534 = vunpack.c.h.b16 %v101
    %v535 = vunpack.c.l.b16 %v102
    %v536 = vunpack.c.h.b16 %v102
    %v537 = vunpack.c.l.b16 %v103
    %v538 = vunpack.c.h.b16 %v103
    %v539 = vunpack.c.l.b16 %v104
    %v540 = vunpack.c.h.b16 %v104
    %v541 = vunpack.c.l.b16 %v105
    %v542 = vunpack.c.h.b16 %v105
    %v543 = vunpack.c.l.b16 %v106
    %v544 = vunpack.c.h.b16 %v106
    %v545 = vunpack.c.l.b16 %v107
    %v546 = vunpack.c.h.b16 %v107
    %v547 = vunpack.c.l.b16 %v108
    %v548 = vunpack.c.h.b16 %v108
    %v549 = vunpack.c.l.b16 %v109
    %v550 = vunpack.c.h.b16 %v109
    %v551 = vunpack.c.l.b16 %v110
    %v552 = vunpack.c.h.b16 %v110
    %v553 = vunpack.c.l.b16 %v111
    %v554 = vunpack.c.h.b16 %v111
    %v555 = vunpack.c.l.b16 %v112
    %v556 = vunpack.c.h.b16 %v112
    %v557 = vunpack.c.l.b16 %v113
    %v558 = vunpack.c.h.b16 %v113
    %v559 = vunpack.c.l.b16 %v114
    %v560 = vunpack.c.h.b16 %v114
    %v561 = vunpack.c.l.b16 %v115
    %v562 = vunpack.c.h.b16 %v115
    %v563 = vunpack.c.l.b16 %v116
    %v564 = vunpack.c.h.b16 %v116
    %v565 = vunpack.c.l.b16 %v117
    %v566 = vunpack.c.h.b16 %v117
    %v567 = vunpack.c.l.b16 %v118
    %v568 = vunpack.c.h.b16 %v118
    %v569 = vunpack.c.l.b16 %v119
    %v570 = vunpack.c.h.b16 %v119
    %v571 = vunpack.c.l.b16 %v120
    %v572 = vunpack.c.h.b16 %v120
    %v573 = vunpack.c.l.b16 %v121
    %v574 = vunpack.c.h.b16 %v121
    %v575 = vunpack.c.l.b16 %v122
    %v576 = vunpack.c.h.b16 %v122
    %v577 = vunpack.c.l.b16 %v123
    %v578 = vunpack.c.h.b16 %v123
    %v579 = vunpack.c.l.b16 %v124
    %v580 = vunpack.c.h.b16 %v124
    %v581 = vunpack.c.l.b16 %v125
    %v582 = vunpack.c.h.b16 %v125
    %v583 = vunpack.c.l.b16 %v126
    %v584 = vunpack.c.h.b16 %v126
    %v585 = vunpack.c.l.b16 %v127
    %v586 = vunpack.c.h.b16 %v127
    %v587 = vunpack.c.l.b16 %v128
    %v588 = vunpack.c.h.b16 %v128
    %v589 = vunpack.c.l.b16 %v129
    %v590 = vunpack.c.h.b16 %v129
    %v591 = vunpack.c.l.b16 %v130
    %v592 = vunpack.c.h.b16 %v130
    %v593 = vunpack.c.l.b16 %v131
    %v594 = vunpack.c.h.b16 %v131
    %v595 = vunpack.c.l.b16 %v132
    %v596 = vunpack.c.h.b16 %v132
    %v597 = vunpack.c.l.b16 %v133
    %v598 = vunpack.c.h.b16 %v133
    %v599 = vunpack.c.l.b16 %v134
    %v600 = vunpack.c.h.b16 %v134
    %v601 = vunpack.c.l.b16 %v135
    %v602 = vunpack.c.h.b16 %v135
    %v603 = vunpack.c.l.b16 %v136
    %v604 = vunpack.c.h.b16 %v136
    %v605 = vunpack.c.l.b16 %v137
    %v606 = vunpack.c.h.b16 %v137
    %v607 = vunpack.c.l.b16 %v138
    %v608 = vunpack.c.h.b16 %v138
    %v609 = vunpack.c.l.b16 %v139
    %v610 = vunpack.c.h.b16 %v139
    %v611 = vunpack.c.l.b16 %v140
    %v612 = vunpack.c.h.b16 %v140
    %v613 = vunpack.c.l.b16 %v141
    %v614 = vunpack.c.h.b16 %v141
    %v615 = vunpack.c.l.b16 %v142
    %v616 = vunpack.c.h.b16 %v142
    %v617 = vunpack.c.l.b16 %v143
    %v618 = vunpack.c.h.b16 %v143
    %v619 = vunpack.c.l.b16 %v144
    %v620 = vunpack.c.h.b16 %v144
    %v621 = vunpack.c.l.b16 %v145
    %v622 = vunpack.c.h.b16 %v145
    %v623 = vunpack.c.l.b16 %v146
    %v624 = vunpack.c.h.b16 %v146
    %v625 = vunpack.c.l.b16 %v147
    %v626 = vunpack.c.h.b16 %v147
    %v627 = vunpack.c.l.b16 %v148
    %v628 = vunpack.c.h.b16 %v148
    %v629 = vunpack.c.l.b16 %v149
    %v630 = vunpack.c.h.b16 %v149
    %v631 = vunpack.c.l.b16 %v150
    %v632 = vunpack.c.h.b16 %v150
    %v633 = vunpack.c.l.b16 %v151
    %v634 = vunpack.c.h.b16 %v151
    %v635 = vunpack.c.l.b16 %v152
    %v636 = vunpack.c.h.b16 %v152
    %v637 = vunpack.c.l.b16 %v153
    %v638 = vunpack.c.h.b16 %v153
    %v639 = vunpack.c.l.b16 %v154
    %v640 = vunpack.c.h.b16 %v154
    %v641 = vunpack.c.l.b16 %v155
    %v642 = vunpack.c.h.b16 %v155
    %v643 = vunpack.c.l.b16 %v156
    %v644 = vunpack.c.h.b16 %v156
    %v645 = vunpack.c.l.b16 %v157
    %v646 = vunpack.c.h.b16 %v157
    %v647 = vunpack.c.l.b16 %v158
    %v648 = vunpack.c.h.b16 %v158
    %v649 = vunpack.c.l.b16 %v159
    %v650 = vunpack.c.h.b16 %v159
    %v651 = vunpack.c.l.b16 %v160
    %v652 = vunpack.c.h.b16 %v160
    %v653 = vunpack.c.l.b16 %v161
    %v654 = vunpack.c.h.b16 %v161
    %v655 = vunpack.c.l.b16 %v162
    %v656 = vunpack.c.h.b16 %v162
    %v657 = vunpack.c.l.b16 %v163
    %v658 = vunpack.c.h.b16 %v163
    %v659 = vunpack.c.l.b16 %v164
    %v660 = vunpack.c.h.b16 %v164
    %v661 = vunpack.c.l.b16 %v165
    %v662 = vunpack.c.h.b16 %v165
    %v663 = vunpack.c.l.b16 %v166
    %v664 = vunpack.c.h.b16 %v166
    %v665 = vunpack.c.l.b16 %v167
    %v666 = vunpack.c.h.b16 %v167
    %v667 = vunpack.c.l.b16 %v168
    %v668 = vunpack.c.h.b16 %v168
    %v669 = vunpack.c.l.b16 %v169
    %v670 = vunpack.c.h.b16 %v169
    %v671 = vunpack.c.l.b16 %v170
    %v672 = vunpack.c.h.b16 %v170
    %v673 = vunpack.c.l.b16 %v171
    %v674 = vunpack.c.h.b16 %v171
    %v675 = vunpack.c.l.b16 %v172
    %v676 = vunpack.c.h.b16 %v172
    %v677 = vunpack.c.l.b16 %v173
    %v678 = vunpack.c.h.b16 %v173
    %v679 = vunpack.c.l.b16 %v174
    %v680 = vunpack.c.h.b16 %v174
    %v681 = vunpack.c.l.b16 %v175
    %v682 = vunpack.c.h.b16 %v175
    %v683 = vunpack.c.l.b16 %v176
    %v684 = vunpack.c.h.b16 %v176
    %v685 = vunpack.c.l.b16 %v177
    %v686 = vunpack.c.h.b16 %v177
    %v687 = vunpack.c.l.b16 %v178
    %v688 = vunpack.c.h.b16 %v178
    %v689 = vunpack.c.l.b16 %v179
    %v690 = vunpack.c.h.b16 %v179
    %v691 = vunpack.c.l.b16 %v180
    %v692 = vunpack.c.h.b16 %v180
    %v693 = vunpack.c.l.b16 %v181
    %v694 = vunpack.c.h.b16 %v181
    %v695 = vunpack.c.l.b16 %v182
    %v696 = vunpack.c.h.b16 %v182
    %v697 = vunpack.c.l.b16 %v183
    %v698 = vunpack.c.h.b16 %v183
    %v699 = vunpack.c.l.b16 %v184
    %v700 = vunpack.c.h.b16 %v184
    %v701 = vunpack.c.l.b16 %v185
    %v702 = vunpack.c.h.b16 %v185
    %v703 = vunpack.c.l.b16 %v186
    %v704 = vunpack.c.h.b16 %v186
    %v705 = vunpack.c.l.b16 %v187
    %v706 = vunpack.c.h.b16 %v187
    %v707 = vunpack.c.l.b16 %v188
    %v708 = vunpack.c.h.b16 %v188
    %v709 = vunpack.c.l.b16 %v189
    %v710 = vunpack.c.h.b16 %v189
    %v711 = vunpack.c.l.b16 %v190
    %v712 = vunpack.c.h.b16 %v190
    %v713 = vunpack.c.l.b16 %v191
    %v714 = vunpack.c.h.b16 %v191
    %v715 = vunpack.c.l.b16 %v192
    %v716 = vunpack.c.h.b16 %v192
    %v717 = vunpack.c.l.b16 %v193
    %v718 = vunpack.c.h.b16 %v193
    %v719 = vunpack.c.l.b16 %v194
    %v720 = vunpack.c.h.b16 %v194
    %v721 = vunpack.c.l.b16 %v195
    %v722 = vunpack.c.h.b16 %v195
    %v723 = vunpack.c.l.b16 %v196
    %v724 = vunpack.c.h.b16 %v196
    %v725 = vunpack.c.l.b16 %v197
    %v726 = vunpack.c.h.b16 %v197
    %v727 = vunpack.c.l.b16 %v198
    %v728 = vunpack.c.h.b16 %v198
    %v729 = vunpack.c.l.b16 %v199
    %v730 = vunpack.c.h.b16 %v199
    %v731 = vunpack.c.l.b16 %v200
    %v732 = vunpack.c.h.b16 %v200
    %v733 = vunpack.c.l.b16 %v201
    %v734 = vunpack.c.h.b16 %v201
    %v735 = vunpack.c.l.b16 %v202
    %v736 = vunpack.c.h.b16 %v202
    %v737 = vunpack.c.l.b16 %v203
    %v738 = vunpack.c.h.b16 %v203
    %v739 = vunpack.c.l.b16 %v204
    %v740 = vunpack.c.h.b16 %v204
    %v741 = vunpack.c.l.b16 %v205
    %v742 = vunpack.c.h.b16 %v205
    %v743 = vunpack.c.l.b16 %v206
    %v744 = vunpack.c.h.b16 %v206
    %v745 = vunpack.c.l.b16 %v207
    %v746 = vunpack.c.h.b16 %v207
    %v747 = vunpack.c.l.b16 %v208
    %v748 = vunpack.c.h.b16 %v208
    %v749 = vunpack.c.l.b16 %v209
    %v750 = vunpack.c.h.b16 %v209
    %v751 = vunpack.c.l.b16 %v210
    %v752 = vunpack.c.h.b16 %v210
    %v753 = vunpack.c.l.b16 %v211
    %v754 = vunpack.c.h.b16 %v211
    %v755 = vunpack.c.l.b16 %v212
    %v756 = vunpack.c.h.b16 %v212
    %v757 = vunpack.c.l.b16 %v213
    %v758 = vunpack.c.h.b16 %v213
    %v759 = vunpack.c.l.b16 %v214
    %v760 = vunpack.c.h.b16 %v214
    %v761 = vunpack.c.l.b16 %v215
    %v762 = vunpack.c.h.b16 %v215
    %v763 = vunpack.c.l.b16 %v216
    %v764 = vunpack.c.h.b16 %v216
    %v765 = vunpack.c.l.b16 %v217
    %v766 = vunpack.c.h.b16 %v217
    %v767 = vunpack.c.l.b16 %v218
    %v768 = vunpack.c.h.b16 %v218
    %v769 = vunpack.c.l.b16 %v219
    %v770 = vunpack.c.h.b16 %v219
    %v771 = vunpack.c.l.b16 %v220
    %v772 = vunpack.c.h.b16 %v220
    %v773 = vunpack.c.l.b16 %v221
    %v774 = vunpack.c.h.b16 %v221
    %v775 = vunpack.c.l.b16 %v222
    %v776 = vunpack.c.h.b16 %v222
    %v777 = vunpack.c.l.b16 %v223
    %v778 = vunpack.c.h.b16 %v223
    %v779 = vunpack.c.l.b16 %v224
    %v780 = vunpack.c.h.b16 %v224
    %v781 = vunpack.c.l.b16 %v225
    %v782 = vunpack.c.h.b16 %v225
    %v783 = vunpack.c.l.b16 %v226
    %v784 = vunpack.c.h.b16 %v226
    %v785 = vunpack.c.l.b16 %v227
    %v786 = vunpack.c.h.b16 %v227
    %v787 = vunpack.c.l.b16 %v228
    %v788 = vunpack.c.h.b16 %v228
    %v789 = vunpack.c.l.b16 %v229
    %v790 = vunpack.c.h.b16 %v229
    %v791 = vunpack.c.l.b16 %v230
    %v792 = vunpack.c.h.b16 %v230
    %v793 = vunpack.c.l.b16 %v231
    %v794 = vunpack.c.h.b16 %v231
    %v795 = vunpack.c.l.b16 %v232
    %v796 = vunpack.c.h.b16 %v232
    %v797 = vunpack.c.l.b16 %v233
    %v798 = vunpack.c.h.b16 %v233
    %v799 = vunpack.c.l.b16 %v234
    %v800 = vunpack.c.h.b16 %v234
    %v801 = vunpack.c.l.b16 %v235
    %v802 = vunpack.c.h.b16 %v235
    %v803 = vunpack.c.l.b16 %v236
    %v804 = vunpack.c.h.b16 %v236
    %v805 = vunpack.c.l.b16 %v237
    %v806 = vunpack.c.h.b16 %v237
    %v807 = vunpack.c.l.b16 %v238
    %v808 = vunpack.c.h.b16 %v238
    %v809 = vunpack.c.l.b16 %v239
    %v810 = vunpack.c.h.b16 %v239
    %v811 = vunpack.c.l.b16 %v240
    %v812 = vunpack.c.h.b16 %v240
    %v813 = vunpack.c.l.b16 %v241
    %v814 = vunpack.c.h.b16 %v241
    %v815 = vunpack.c.l.b16 %v242
    %v816 = vunpack.c.h.b16 %v242
    %v817 = vunpack.c.l.b16 %v243
    %v818 = vunpack.c.h.b16 %v243
    %v819 = vunpack.c.l.b16 %v244
    %v820 = vunpack.c.h.b16 %v244
    %v821 = vunpack.c.l.b16 %v245
    %v822 = vunpack.c.h.b16 %v245
    %v823 = vunpack.c.l.b16 %v246
    %v824 = vunpack.c.h.b16 %v246
    %v825 = vunpack.c.l.b16 %v247
    %v826 = vunpack.c.h.b16 %v247
    %v827 = vunpack.c.l.b16 %v248
    %v828 = vunpack.c.h.b16 %v248
    %v829 = vunpack.c.l.b16 %v249
    %v830 = vunpack.c.h.b16 %v249
    %v831 = vunpack.c.l.b16 %v250
    %v832 = vunpack.c.h.b16 %v250
    %v833 = vunpack.c.l.b16 %v251
    %v834 = vunpack.c.h.b16 %v251
    %v835 = vunpack.c.l.b16 %v252
    %v836 = vunpack.c.h.b16 %v252
    %v837 = vunpack.c.l.b16 %v253
    %v838 = vunpack.c.h.b16 %v253
    %v839 = vunpack.c.l.b16 %v254
    %v840 = vunpack.c.h.b16 %v254
    %v841 = vunpack.c.l.b16 %v255
    %v842 = vunpack.c.h.b16 %v255
    %v843 = vunpack.c.l.b16 %v256
    %v844 = vunpack.c.h.b16 %v256
    %v845 = vunpack.c.l.b16 %v257
    %v846 = vunpack.c.h.b16 %v257
    %v847 = vunpack.c.l.b16 %v258
    %v848 = vunpack.c.h.b16 %v258
    %v849 = vunpack.c.l.b16 %v259
    %v850 = vunpack.c.h.b16 %v259
    %v851 = vunpack.c.l.b16 %v260
    %v852 = vunpack.c.h.b16 %v260
    %v853 = vunpack.c.l.b16 %v261
    %v854 = vunpack.c.h.b16 %v261
    %v855 = vunpack.c.l.b16 %v262
    %v856 = vunpack.c.h.b16 %v262
    %v857 = vunpack.c.l.b16 %v263
    %v858 = vunpack.c.h.b16 %v263
    %v859 = vunpack.c.l.b16 %v264
    %v860 = vunpack.c.h.b16 %v264
    %v861 = vunpack.c.l.b16 %v265
    %v862 = vunpack.c.h.b16 %v265
    %v863 = vunpack.c.l.b16 %v266
    %v864 = vunpack.c.h.b16 %v266
    %v865 = vunpack.c.l.b16 %v267
    %v866 = vunpack.c.h.b16 %v267
    %v867 = vunpack.c.l.b16 %v268
    %v868 = vunpack.c.h.b16 %v268
    %v869 = vunpack.c.l.b16 %v269
    %v870 = vunpack.c.h.b16 %v269
    %v871 = vunpack.c.l.b16 %v270
    %v872 = vunpack.c.h.b16 %v270
    %v873 = vunpack.c.l.b16 %v271
    %v874 = vunpack.c.h.b16 %v271
    %v875 = vunpack.c.l.b16 %v272
    %v876 = vunpack.c.h.b16 %v272
    %v877 = vunpack.c.l.b16 %v273
    %v878 = vunpack.c.h.b16 %v273
    %v879 = vunpack.c.l.b16 %v274
    %v880 = vunpack.c.h.b16 %v274
    %v881 = vunpack.c.l.b16 %v275
    %v882 = vunpack.c.h.b16 %v275
    %v883 = vunpack.c.l.b16 %v276
    %v884 = vunpack.c.h.b16 %v276
    %v885 = vunpack.c.l.b16 %v277
    %v886 = vunpack.c.h.b16 %v277
    %v887 = vunpack.c.l.b16 %v278
    %v888 = vunpack.c.h.b16 %v278
    %v889 = vpack.c.b16 %v501, %v497
    %v890 = vpack.c.b16 %v502, %v498
    %v891 = vpack.c.b16 %v503, %v499
    %v892 = vpack.c.b16 %v504, %v500
    %v893 = vpack.c.b16 %v509, %v505
    %v894 = vpack.c.b16 %v510, %v506
    %v895 = vpack.c.b16 %v511, %v507
    %v896 = vpack.c.b16 %v512, %v508
    %v897 = vpack.c.b16 %v517, %v513
    %v898 = vpack.c.b16 %v518, %v514
    %v899 = vpack.c.b16 %v519, %v515
    %v900 = vpack.c.b16 %v520, %v516
    %v901 = vpack.c.b16 %v525, %v521
    %v902 = vpack.c.b16 %v526, %v522
    %v903 = vpack.c.b16 %v527, %v523
    %v904 = vpack.c.b16 %v528, %v524
    %v905 = vpack.c.b16 %v533, %v529
    %v906 = vpack.c.b16 %v534, %v530
    %v907 = vpack.c.b16 %v535, %v531
    %v908 = vpack.c.b16 %v536, %v532
    %v909 = vpack.c.b16 %v541, %v537
    %v910 = vpack.c.b16 %v542, %v538
    %v911 = vpack.c.b16 %v543, %v539
    %v912 = vpack.c.b16 %v544, %v540
    %v913 = vpack.c.b16 %v549, %v545
    %v914 = vpack.c.b16 %v550, %v546
    %v915 = vpack.c.b16 %v551, %v547
    %v916 = vpack.c.b16 %v552, %v548
    %v917 = vpack.c.b16 %v557, %v553
    %v918 = vpack.c.b16 %v558, %v554
    %v919 = vpack.c.b16 %v559, %v555
    %v920 = vpack.c.b16 %v560, %v556
    %v921 = vpack.c.b16 %v565, %v561
    %v922 = vpack.c.b16 %v566, %v562
    %v923 = vpack.c.b16 %v567, %v563
    %v924 = vpack.c.b16 %v568, %v564
    %v925 = vpack.c.b16 %v573, %v569
    %v926 = vpack.c.b16 %v574, %v570
    %v927 = vpack.c.b16 %v575, %v571
    %v928 = vpack.c.b16 %v576, %v572
    %v929 = vpack.c.b16 %v581, %v577
    %v930 = vpack.c.b16 %v582, %v578
    %v931 = vpack.c.b16 %v583, %v579
    %v932 = vpack.c.b16 %v584, %v580
    %v933 = vpack.c.b16 %v589, %v585
    %v934 = vpack.c.b16 %v590, %v586
    %v935 = vpack.c.b16 %v591, %v587
    %v936 = vpack.c.b16 %v592, %v588
    %v937 = vpack.c.b16 %v597, %v593
    %v938 = vpack.c.b16 %v598, %v594
    %v939 = vpack.c.b16 %v599, %v595
    %v940 = vpack.c.b16 %v600, %v596
    %v941 = vpack.c.b16 %v605, %v601
    %v942 = vpack.c.b16 %v606, %v602
    %v943 = vpack.c.b16 %v607, %v603
    %v944 = vpack.c.b16 %v608, %v604
    %v945 = vpack.c.b16 %v613, %v609
    %v946 = vpack.c.b16 %v614, %v610
    %v947 = vpack.c.b16 %v615, %v611
    %v948 = vpack.c.b16 %v616, %v612
    %v949 = vpack.c.b16 %v621, %v617
    %v950 = vpack.c.b16 %v622, %v618
    %v951 = vpack.c.b16 %v623, %v619
    %v952 = vpack.c.b16 %v624, %v620
    %v953 = vpack.c.b16 %v629, %v625
    %v954 = vpack.c.b16 %v630, %v626
    %v955 = vpack.c.b16 %v631, %v627
    %v956 = vpack.c.b16 %v632, %v628
    %v957 = vpack.c.b16 %v637, %v633
    %v958 = vpack.c.b16 %v638, %v634
    %v959 = vpack.c.b16 %v639, %v635
    %v960 = vpack.c.b16 %v640, %v636
    %v961 = vpack.c.b16 %v645, %v641
    %v962 = vpack.c.b16 %v646, %v642
    %v963 = vpack.c.b16 %v647, %v643
    %v964 = vpack.c.b16 %v648, %v644
    %v965 = vpack.c.b16 %v653, %v649
    %v966 = vpack.c.b16 %v654, %v650
    %v967 = vpack.c.b16 %v655, %v651
    %v968 = vpack.c.b16 %v656, %v652
    %v969 = vpack.c.b16 %v661, %v657
    %v970 = vpack.c.b16 %v662, %v658
    %v971 = vpack.c.b16 %v663, %v659
    %v972 = vpack.c.b16 %v664, %v660
    %v973 = vpack.c.b16 %v669, %v665
    %v974 = vpack.c.b16 %v670, %v666
    %v975 = vpack.c.b16 %v671, %v667
    %v976 = vpack.c.b16 %v672, %v668
    %v977 = vpack.c.b16 %v677, %v673
    %v978 = vpack.c.b16 %v678, %v674
    %v979 = vpack.c.b16 %v679, %v675
    %v980 = vpack.c.b16 %v680, %v676
    %v981 = vpack.c.b16 %v685, %v681
    %v982 = vpack.c.b16 %v686, %v682
    %v983 = vpack.c.b16 %v687, %v683
    %v984 = vpack.c.b16 %v688, %v684
    %v985 = vpack.c.b16 %v693, %v689
    %v986 = vpack.c.b16 %v694, %v690
    %v987 = vpack.c.b16 %v695, %v691
    %v988 = vpack.c.b16 %v696, %v692
    %v989 = vpack.c.b16 %v701, %v697
    %v990 = vpack.c.b16 %v702, %v698
    %v991 = vpack.c.b16 %v703, %v699
    %v992 = vpack.c.b16 %v704, %v700
    %v993 = vpack.c.b16 %v709, %v705
    %v994 = vpack.c.b16 %v710, %v706
    %v995 = vpack.c.b16 %v711, %v707
    %v996 = vpack.c.b16 %v712, %v708
    %v997 = vpack.c.b16 %v717, %v713
    %v998 = vpack.c.b16 %v718, %v714
    %v999 = vpack.c.b16 %v719, %v715
    %v1000 = vpack.c.b16 %v720, %v716
    %v1001 = vpack.c.b16 %v725, %v721
    %v1002 = vpack.c.b16 %v726, %v722
    %v1003 = vpack.c.b16 %v727, %v723
    %v1004 = vpack.c.b16 %v728, %v724
    %v1005 = vpack.c.b16 %v733, %v729
    %v1006 = vpack.c.b16 %v734, %v730
    %v1007 = vpack.c.b16 %v735, %v731
    %v1008 = vpack.c.b16 %v736, %v732
    %v1009 = vpack.c.b16 %v741, %v737
    %v1010 = vpack.c.b16 %v742, %v738
    %v1011 = vpack.c.b16 %v743, %v739
    %v1012 = vpack.c.b16 %v744, %v740
    %v1013 = vpack.c.b16 %v749, %v745
    %v1014 = vpack.c.b16 %v750, %v746
    %v1015 = vpack.c.b16 %v751, %v747
    %v1016 = vpack.c.b16 %v752, %v748
    %v1017 = vpack.c.b16 %v757, %v753
    %v1018 = vpack.c.b16 %v758, %v754
    %v1019 = vpack.c.b16 %v759, %v755
    %v1020 = vpack.c.b16 %v760, %v756
    %v1021 = vpack.c.b16 %v765, %v761
    %v1022 = vpack.c.b16 %v766, %v762
    %v1023 = vpack.c.b16 %v767, %v763
    %v1024 = vpack.c.b16 %v768, %v764
    %v1025 = vpack.c.b16 %v773, %v769
    %v1026 = vpack.c.b16 %v774, %v770
    %v1027 = vpack.c.b16 %v775, %v771
    %v1028 = vpack.c.b16 %v776, %v772
    %v1029 = vpack.c.b16 %v781, %v777
    %v1030 = vpack.c.b16 %v782, %v778
    %v1031 = vpack.c.b16 %v783, %v779
    %v1032 = vpack.c.b16 %v784, %v780
    %v1033 = vpack.c.b16 %v789, %v785
    %v1034 = vpack.c.b16 %v790, %v786
    %v1035 = vpack.c.b16 %v791, %v787
    %v1036 = vpack.c.b16 %v792, %v788
    %v1037 = vpack.c.b16 %v797, %v793
    %v1038 = vpack.c.b16 %v798, %v794
    %v1039 = vpack.c.b16 %v799, %v795
    %v1040 = vpack.c.b16 %v800, %v796
    %v1041 = vpack.c.b16 %v805, %v801
    %v1042 = vpack.c.b16 %v806, %v802
    %v1043 = vpack.c.b16 %v807, %v803
    %v1044 = vpack.c.b16 %v808, %v804
    %v1045 = vpack.c.b16 %v813, %v809
    %v1046 = vpack.c.b16 %v814, %v810
    %v1047 = vpack.c.b16 %v815, %v811
    %v1048 = vpack.c.b16 %v816, %v812
    %v1049 = vpack.c.b16 %v821, %v817
    %v1050 = vpack.c.b16 %v822, %v818
    %v1051 = vpack.c.b16 %v823, %v819
    %v1052 = vpack.c.b16 %v824, %v820
    %v1053 = vpack.c.b16 %v829, %v825
    %v1054 = vpack.c.b16 %v830, %v826
    %v1055 = vpack.c.b16 %v831, %v827
    %v1056 = vpack.c.b16 %v832, %v828
    %v1057 = vpack.c.b16 %v837, %v833
    %v1058 = vpack.c.b16 %v838, %v834
    %v1059 = vpack.c.b16 %v839, %v835
    %v1060 = vpack.c.b16 %v840, %v836
    %v1061 = vpack.c.b16 %v845, %v841
    %v1062 = vpack.c.b16 %v846, %v842
    %v1063 = vpack.c.b16 %v847, %v843
    %v1064 = vpack.c.b16 %v848, %v844
    %v1065 = vpack.c.b16 %v853, %v849
    %v1066 = vpack.c.b16 %v854, %v850
    %v1067 = vpack.c.b16 %v855, %v851
    %v1068 = vpack.c.b16 %v856, %v852
    %v1069 = vpack.c.b16 %v861, %v857
    %v1070 = vpack.c.b16 %v862, %v858
    %v1071 = vpack.c.b16 %v863, %v859
    %v1072 = vpack.c.b16 %v864, %v860
    %v1073 = vpack.c.b16 %v869, %v865
    %v1074 = vpack.c.b16 %v870, %v866
    %v1075 = vpack.c.b16 %v871, %v867
    %v1076 = vpack.c.b16 %v872, %v868
    %v1077 = vpack.c.b16 %v877, %v873
    %v1078 = vpack.c.b16 %v878, %v874
    %v1079 = vpack.c.b16 %v879, %v875
    %v1080 = vpack.c.b16 %v880, %v876
    %v1081 = vpack.c.b16 %v885, %v881
    %v1082 = vpack.c.b16 %v886, %v882
    %v1083 = vpack.c.b16 %v887, %v883
    %v1084 = vpack.c.b16 %v888, %v884
    %vm1281 = vcmask 130048
    %v1283 = vsel %vm1281, %v82, 0
    %1285 = vmatprep.subr.bf16.mxu0 %v918
    %1286 = vmatpush1.bf16.msra.mxu0 %v917
    %1287 = vmatprep.subr.bf16.mxu0 %v914
    %1288 = vmatpush1.bf16.msra.mxu0 %v913
    %1289 = vmatprep.subr.bf16.mxu0 %v910
    %1290 = vmatpush1.bf16.msra.mxu0 %v909
    %1291 = vmatprep.subr.bf16.mxu0 %v906
    %1292 = vmatpush1.bf16.msra.mxu0 %v905
    %1293 = vmatprep.subr.bf16.mxu0 %v902
    %1294 = vmatpush1.bf16.msra.mxu0 %v901
    %1295 = vmatprep.subr.bf16.mxu0 %v898
    %1296 = vmatpush1.bf16.msra.mxu0 %v897
    %1297 = vmatprep.subr.bf16.mxu0 %v894
    %1298 = vmatpush1.bf16.msra.mxu0 %v893
    %1299 = vmatprep.subr.bf16.mxu0 %v890
    %1300 = vmatpush1.bf16.msra.mxu0 %v889
    %1301 = vmatprep.subr.bf16.mxu0 %v950
    %1302 = vmatpush2.bf16.msra.mxu0 %v949
    %1303 = vmatprep.subr.bf16.mxu0 %v946
    %1304 = vmatpush2.bf16.msra.mxu0 %v945
    %1305 = vmatprep.subr.bf16.mxu0 %v942
    %1306 = vmatpush2.bf16.msra.mxu0 %v941
    %1307 = vmatprep.subr.bf16.mxu0 %v938
    %1308 = vmatpush2.bf16.msra.mxu0 %v937
    %1309 = vmatprep.subr.bf16.mxu0 %v934
    %1310 = vmatpush2.bf16.msra.mxu0 %v933
    %1311 = vmatprep.subr.bf16.mxu0 %v930
    %1312 = vmatpush2.bf16.msra.mxu0 %v929
    %1313 = vmatprep.subr.bf16.mxu0 %v926
    %1314 = vmatpush2.bf16.msra.mxu0 %v925
    %1315 = vmatprep.subr.bf16.mxu0 %v922
    %1316 = vmatpush2.bf16.msra.mxu0 %v921
    %1317 = vmatprep.mubr.bf16.mxu0 %v77
    %1318 = vmatmul.mubr.bf16.gmra.mxu0 %v76
    %v1319 = vpop.f32.mrf.mxu0
    %v1320 = vadd.f32 %v284, %v1319
    %v1321 = vpop.f32.mrf.mxu0
    %v1322 = vadd.f32 %v288, %v1321
    %v1323 = vpop.f32.mrf.mxu0
    %v1324 = vpop.f32.mrf.mxu0
    %1325 = vdwg.mxu0
    %1326 = vmatprep.subr.bf16.mxu0 %v982
    %1327 = vmatpush1.bf16.msra.mxu0 %v981
    %1328 = vmatprep.subr.bf16.mxu0 %v978
    %1329 = vmatpush1.bf16.msra.mxu0 %v977
    %1330 = vmatprep.subr.bf16.mxu0 %v974
    %1331 = vmatpush1.bf16.msra.mxu0 %v973
    %1332 = vmatprep.subr.bf16.mxu0 %v970
    %1333 = vmatpush1.bf16.msra.mxu0 %v969
    %1334 = vmatprep.subr.bf16.mxu0 %v966
    %1335 = vmatpush1.bf16.msra.mxu0 %v965
    %1336 = vmatprep.subr.bf16.mxu0 %v962
    %1337 = vmatpush1.bf16.msra.mxu0 %v961
    %1338 = vmatprep.subr.bf16.mxu0 %v958
    %1339 = vmatpush1.bf16.msra.mxu0 %v957
    %1340 = vmatprep.subr.bf16.mxu0 %v954
    %1341 = vmatpush1.bf16.msra.mxu0 %v953
    %1342 = vmatprep.subr.bf16.mxu0 %v1014
    %1343 = vmatpush2.bf16.msra.mxu0 %v1013
    %1344 = vmatprep.subr.bf16.mxu0 %v1010
    %1345 = vmatpush2.bf16.msra.mxu0 %v1009
    %1346 = vmatprep.subr.bf16.mxu0 %v1006
    %1347 = vmatpush2.bf16.msra.mxu0 %v1005
    %1348 = vmatprep.subr.bf16.mxu0 %v1002
    %1349 = vmatpush2.bf16.msra.mxu0 %v1001
    %1350 = vmatprep.subr.bf16.mxu0 %v998
    %1351 = vmatpush2.bf16.msra.mxu0 %v997
    %1352 = vmatprep.subr.bf16.mxu0 %v994
    %1353 = vmatpush2.bf16.msra.mxu0 %v993
    %1354 = vmatprep.subr.bf16.mxu0 %v990
    %1355 = vmatpush2.bf16.msra.mxu0 %v989
    %1356 = vmatprep.subr.bf16.mxu0 %v986
    %1357 = vmatpush2.bf16.msra.mxu0 %v985
    %1358 = vmatprep.mubr.bf16.mxu0 %v79
    %1359 = vmatmul.mubr.bf16.gmra.mxu0 %v78
    %v1360 = vpop.f32.mrf.mxu0
    %v1361 = vadd.f32 %v1320, %v1360
    %v1362 = vpop.f32.mrf.mxu0
    %v1363 = vadd.f32 %v1322, %v1362
    %v1364 = vpop.f32.mrf.mxu0
    %v1365 = vpop.f32.mrf.mxu0
    %1366 = vdwg.mxu0
    %1367 = vmatprep.subr.bf16.mxu0 %v1046
    %1368 = vmatpush1.bf16.msra.mxu0 %v1045
    %1369 = vmatprep.subr.bf16.mxu0 %v1042
    %1370 = vmatpush1.bf16.msra.mxu0 %v1041
    %1371 = vmatprep.subr.bf16.mxu0 %v1038
    %1372 = vmatpush1.bf16.msra.mxu0 %v1037
    %1373 = vmatprep.subr.bf16.mxu0 %v1034
    %1374 = vmatpush1.bf16.msra.mxu0 %v1033
    %1375 = vmatprep.subr.bf16.mxu0 %v1030
    %1376 = vmatpush1.bf16.msra.mxu0 %v1029
    %1377 = vmatprep.subr.bf16.mxu0 %v1026
    %1378 = vmatpush1.bf16.msra.mxu0 %v1025
    %1379 = vmatprep.subr.bf16.mxu0 %v1022
    %1380 = vmatpush1.bf16.msra.mxu0 %v1021
    %1381 = vmatprep.subr.bf16.mxu0 %v1018
    %1382 = vmatpush1.bf16.msra.mxu0 %v1017
    %1383 = vmatprep.subr.bf16.mxu0 %v1078
    %1384 = vmatpush2.bf16.msra.mxu0 %v1077
    %1385 = vmatprep.subr.bf16.mxu0 %v1074
    %1386 = vmatpush2.bf16.msra.mxu0 %v1073
    %1387 = vmatprep.subr.bf16.mxu0 %v1070
    %1388 = vmatpush2.bf16.msra.mxu0 %v1069
    %1389 = vmatprep.subr.bf16.mxu0 %v1066
    %1390 = vmatpush2.bf16.msra.mxu0 %v1065
    %1391 = vmatprep.subr.bf16.mxu0 %v1062
    %1392 = vmatpush2.bf16.msra.mxu0 %v1061
    %1393 = vmatprep.subr.bf16.mxu0 %v1058
    %1394 = vmatpush2.bf16.msra.mxu0 %v1057
    %1395 = vmatprep.subr.bf16.mxu0 %v1054
    %1396 = vmatpush2.bf16.msra.mxu0 %v1053
    %1397 = vmatprep.subr.bf16.mxu0 %v1050
    %1398 = vmatpush2.bf16.msra.mxu0 %v1049
    %1399 = vmatprep.mubr.bf16.mxu0 %v81
    %1400 = vmatmul.mubr.bf16.gmra.mxu0 %v80
    %v1401 = vpop.f32.mrf.mxu0
    %v1402 = vadd.f32 %v1361, %v1401
    %v1403 = vpop.f32.mrf.mxu0
    %v1404 = vadd.f32 %v1363, %v1403
    %v1405 = vpop.f32.mrf.mxu0
    %v1406 = vpop.f32.mrf.mxu0
    %1407 = vdwg.mxu0
    %1408 = vmatprep.subr.bf16.mxu0 0
    %1409 = vmatpush1.bf16.msra.mxu0 0
    %1410 = vmatprep.subr.bf16.mxu0 0
    %1411 = vmatpush1.bf16.msra.mxu0 0
    %1412 = vmatprep.subr.bf16.mxu0 0
    %1413 = vmatpush1.bf16.msra.mxu0 0
    %1414 = vmatprep.subr.bf16.mxu0 0
    %1415 = vmatpush1.bf16.msra.mxu0 0
    %1416 = vmatprep.subr.bf16.mxu0 0
    %1417 = vmatpush1.bf16.msra.mxu0 0
    %1418 = vmatprep.subr.bf16.mxu0 0
    %1419 = vmatpush1.bf16.msra.mxu0 0
    %1420 = vmatprep.subr.bf16.mxu0 0
    %1421 = vmatpush1.bf16.msra.mxu0 0
    %1422 = vmatprep.subr.bf16.mxu0 %v1082
    %1423 = vmatpush1.bf16.msra.mxu0 %v1081
    %1424 = vmatprep.subr.bf16.mxu0 0
    %1425 = vmatpush2.bf16.msra.mxu0 0
    %1426 = vmatprep.subr.bf16.mxu0 0
    %1427 = vmatpush2.bf16.msra.mxu0 0
    %1428 = vmatprep.subr.bf16.mxu0 0
    %1429 = vmatpush2.bf16.msra.mxu0 0
    %1430 = vmatprep.subr.bf16.mxu0 0
    %1431 = vmatpush2.bf16.msra.mxu0 0
    %1432 = vmatprep.subr.bf16.mxu0 0
    %1433 = vmatpush2.bf16.msra.mxu0 0
    %1434 = vmatprep.subr.bf16.mxu0 0
    %1435 = vmatpush2.bf16.msra.mxu0 0
    %1436 = vmatprep.subr.bf16.mxu0 0
    %1437 = vmatpush2.bf16.msra.mxu0 0
    %1438 = vmatprep.subr.bf16.mxu0 0
    %1439 = vmatpush2.bf16.msra.mxu0 0
    %1440 = vmatprep.mubr.bf16.mxu0 0
    %1441 = vmatmul.mubr.bf16.gmra.mxu0 %v1283
    %v1442 = vpop.f32.mrf.mxu0
    %v1443 = vadd.f32 %v1402, %v1442
    %v1444 = vpop.f32.mrf.mxu0
    %v1445 = vadd.f32 %v1404, %v1444
    %v1446 = vpop.f32.mrf.mxu0
    %v1447 = vpop.f32.mrf.mxu0
    %1448 = vdwg.mxu0
    %1449 = vmatprep.subr.bf16.mxu0 %v920
    %1450 = vmatpush1.bf16.msra.mxu0 %v919
    %1451 = vmatprep.subr.bf16.mxu0 %v916
    %1452 = vmatpush1.bf16.msra.mxu0 %v915
    %1453 = vmatprep.subr.bf16.mxu0 %v912
    %1454 = vmatpush1.bf16.msra.mxu0 %v911
    %1455 = vmatprep.subr.bf16.mxu0 %v908
    %1456 = vmatpush1.bf16.msra.mxu0 %v907
    %1457 = vmatprep.subr.bf16.mxu0 %v904
    %1458 = vmatpush1.bf16.msra.mxu0 %v903
    %1459 = vmatprep.subr.bf16.mxu0 %v900
    %1460 = vmatpush1.bf16.msra.mxu0 %v899
    %1461 = vmatprep.subr.bf16.mxu0 %v896
    %1462 = vmatpush1.bf16.msra.mxu0 %v895
    %1463 = vmatprep.subr.bf16.mxu0 %v892
    %1464 = vmatpush1.bf16.msra.mxu0 %v891
    %1465 = vmatprep.subr.bf16.mxu0 %v952
    %1466 = vmatpush2.bf16.msra.mxu0 %v951
    %1467 = vmatprep.subr.bf16.mxu0 %v948
    %1468 = vmatpush2.bf16.msra.mxu0 %v947
    %1469 = vmatprep.subr.bf16.mxu0 %v944
    %1470 = vmatpush2.bf16.msra.mxu0 %v943
    %1471 = vmatprep.subr.bf16.mxu0 %v940
    %1472 = vmatpush2.bf16.msra.mxu0 %v939
    %1473 = vmatprep.subr.bf16.mxu0 %v936
    %1474 = vmatpush2.bf16.msra.mxu0 %v935
    %1475 = vmatprep.subr.bf16.mxu0 %v932
    %1476 = vmatpush2.bf16.msra.mxu0 %v931
    %1477 = vmatprep.subr.bf16.mxu0 %v928
    %1478 = vmatpush2.bf16.msra.mxu0 %v927
    %1479 = vmatprep.subr.bf16.mxu0 %v924
    %1480 = vmatpush2.bf16.msra.mxu0 %v923
    %1481 = vmatprep.mubr.bf16.mxu0 %v77
    %1482 = vmatmul.mubr.bf16.gmra.mxu0 %v76
    %v1483 = vpop.f32.mrf.mxu0
    %v1484 = vadd.f32 %v292, %v1483
    %v1485 = vpop.f32.mrf.mxu0
    %v1486 = vadd.f32 %v296, %v1485
    %v1487 = vpop.f32.mrf.mxu0
    %v1488 = vpop.f32.mrf.mxu0
    %1489 = vdwg.mxu0
    %1490 = vmatprep.subr.bf16.mxu0 %v984
    %1491 = vmatpush1.bf16.msra.mxu0 %v983
    %1492 = vmatprep.subr.bf16.mxu0 %v980
    %1493 = vmatpush1.bf16.msra.mxu0 %v979
    %1494 = vmatprep.subr.bf16.mxu0 %v976
    %1495 = vmatpush1.bf16.msra.mxu0 %v975
    %1496 = vmatprep.subr.bf16.mxu0 %v972
    %1497 = vmatpush1.bf16.msra.mxu0 %v971
    %1498 = vmatprep.subr.bf16.mxu0 %v968
    %1499 = vmatpush1.bf16.msra.mxu0 %v967
    %1500 = vmatprep.subr.bf16.mxu0 %v964
    %1501 = vmatpush1.bf16.msra.mxu0 %v963
    %1502 = vmatprep.subr.bf16.mxu0 %v960
    %1503 = vmatpush1.bf16.msra.mxu0 %v959
    %1504 = vmatprep.subr.bf16.mxu0 %v956
    %1505 = vmatpush1.bf16.msra.mxu0 %v955
    %1506 = vmatprep.subr.bf16.mxu0 %v1016
    %1507 = vmatpush2.bf16.msra.mxu0 %v1015
    %1508 = vmatprep.subr.bf16.mxu0 %v1012
    %1509 = vmatpush2.bf16.msra.mxu0 %v1011
    %1510 = vmatprep.subr.bf16.mxu0 %v1008
    %1511 = vmatpush2.bf16.msra.mxu0 %v1007
    %1512 = vmatprep.subr.bf16.mxu0 %v1004
    %1513 = vmatpush2.bf16.msra.mxu0 %v1003
    %1514 = vmatprep.subr.bf16.mxu0 %v1000
    %1515 = vmatpush2.bf16.msra.mxu0 %v999
    %1516 = vmatprep.subr.bf16.mxu0 %v996
    %1517 = vmatpush2.bf16.msra.mxu0 %v995
    %1518 = vmatprep.subr.bf16.mxu0 %v992
    %1519 = vmatpush2.bf16.msra.mxu0 %v991
    %1520 = vmatprep.subr.bf16.mxu0 %v988
    %1521 = vmatpush2.bf16.msra.mxu0 %v987
    %1522 = vmatprep.mubr.bf16.mxu0 %v79
    %1523 = vmatmul.mubr.bf16.gmra.mxu0 %v78
    %v1524 = vpop.f32.mrf.mxu0
    %v1525 = vadd.f32 %v1484, %v1524
    %v1526 = vpop.f32.mrf.mxu0
    %v1527 = vadd.f32 %v1486, %v1526
    %v1528 = vpop.f32.mrf.mxu0
    %v1529 = vpop.f32.mrf.mxu0
    %1530 = vdwg.mxu0
    %1531 = vmatprep.subr.bf16.mxu0 %v1048
    %1532 = vmatpush1.bf16.msra.mxu0 %v1047
    %1533 = vmatprep.subr.bf16.mxu0 %v1044
    %1534 = vmatpush1.bf16.msra.mxu0 %v1043
    %1535 = vmatprep.subr.bf16.mxu0 %v1040
    %1536 = vmatpush1.bf16.msra.mxu0 %v1039
    %1537 = vmatprep.subr.bf16.mxu0 %v1036
    %1538 = vmatpush1.bf16.msra.mxu0 %v1035
    %1539 = vmatprep.subr.bf16.mxu0 %v1032
    %1540 = vmatpush1.bf16.msra.mxu0 %v1031
    %1541 = vmatprep.subr.bf16.mxu0 %v1028
    %1542 = vmatpush1.bf16.msra.mxu0 %v1027
    %1543 = vmatprep.subr.bf16.mxu0 %v1024
    %1544 = vmatpush1.bf16.msra.mxu0 %v1023
    %1545 = vmatprep.subr.bf16.mxu0 %v1020
    %1546 = vmatpush1.bf16.msra.mxu0 %v1019
    %1547 = vmatprep.subr.bf16.mxu0 %v1080
    %1548 = vmatpush2.bf16.msra.mxu0 %v1079
    %1549 = vmatprep.subr.bf16.mxu0 %v1076
    %1550 = vmatpush2.bf16.msra.mxu0 %v1075
    %1551 = vmatprep.subr.bf16.mxu0 %v1072
    %1552 = vmatpush2.bf16.msra.mxu0 %v1071
    %1553 = vmatprep.subr.bf16.mxu0 %v1068
    %1554 = vmatpush2.bf16.msra.mxu0 %v1067
    %1555 = vmatprep.subr.bf16.mxu0 %v1064
    %1556 = vmatpush2.bf16.msra.mxu0 %v1063
    %1557 = vmatprep.subr.bf16.mxu0 %v1060
    %1558 = vmatpush2.bf16.msra.mxu0 %v1059
    %1559 = vmatprep.subr.bf16.mxu0 %v1056
    %1560 = vmatpush2.bf16.msra.mxu0 %v1055
    %1561 = vmatprep.subr.bf16.mxu0 %v1052
    %1562 = vmatpush2.bf16.msra.mxu0 %v1051
    %1563 = vmatprep.mubr.bf16.mxu0 %v81
    %1564 = vmatmul.mubr.bf16.gmra.mxu0 %v80
    %v1565 = vpop.f32.mrf.mxu0
    %v1566 = vadd.f32 %v1525, %v1565
    %v1567 = vpop.f32.mrf.mxu0
    %v1568 = vadd.f32 %v1527, %v1567
    %v1569 = vpop.f32.mrf.mxu0
    %v1570 = vpop.f32.mrf.mxu0
    %1571 = vdwg.mxu0
    %1572 = vmatprep.subr.bf16.mxu0 0
    %1573 = vmatpush1.bf16.msra.mxu0 0
    %1574 = vmatprep.subr.bf16.mxu0 0
    %1575 = vmatpush1.bf16.msra.mxu0 0
    %1576 = vmatprep.subr.bf16.mxu0 0
    %1577 = vmatpush1.bf16.msra.mxu0 0
    %1578 = vmatprep.subr.bf16.mxu0 0
    %1579 = vmatpush1.bf16.msra.mxu0 0
    %1580 = vmatprep.subr.bf16.mxu0 0
    %1581 = vmatpush1.bf16.msra.mxu0 0
    %1582 = vmatprep.subr.bf16.mxu0 0
    %1583 = vmatpush1.bf16.msra.mxu0 0
    %1584 = vmatprep.subr.bf16.mxu0 0
    %1585 = vmatpush1.bf16.msra.mxu0 0
    %1586 = vmatprep.subr.bf16.mxu0 %v1084
    %1587 = vmatpush1.bf16.msra.mxu0 %v1083
    %1588 = vmatprep.subr.bf16.mxu0 0
    %1589 = vmatpush2.bf16.msra.mxu0 0
    %1590 = vmatprep.subr.bf16.mxu0 0
    %1591 = vmatpush2.bf16.msra.mxu0 0
    %1592 = vmatprep.subr.bf16.mxu0 0
    %1593 = vmatpush2.bf16.msra.mxu0 0
    %1594 = vmatprep.subr.bf16.mxu0 0
    %1595 = vmatpush2.bf16.msra.mxu0 0
    %1596 = vmatprep.subr.bf16.mxu0 0
    %1597 = vmatpush2.bf16.msra.mxu0 0
    %1598 = vmatprep.subr.bf16.mxu0 0
    %1599 = vmatpush2.bf16.msra.mxu0 0
    %1600 = vmatprep.subr.bf16.mxu0 0
    %1601 = vmatpush2.bf16.msra.mxu0 0
    %1602 = vmatprep.subr.bf16.mxu0 0
    %1603 = vmatpush2.bf16.msra.mxu0 0
    %1604 = vmatprep.mubr.bf16.mxu0 0
    %1605 = vmatmul.mubr.bf16.gmra.mxu0 %v1283
    %v1606 = vpop.f32.mrf.mxu0
    %v1607 = vadd.f32 %v1566, %v1606
    %v1608 = vpop.f32.mrf.mxu0
    %v1609 = vadd.f32 %v1568, %v1608
    %v1610 = vpop.f32.mrf.mxu0
    %v1611 = vpop.f32.mrf.mxu0
    %1612 = vdwg.mxu0
    %vm1613 = vcmp.gt.f32.partialorder %v1443, 0.0
    %vm1614 = vcmp.gt.f32.partialorder %v1445, 0.0
    %vm1615 = vcmp.gt.f32.partialorder %v1607, 0.0
    %vm1616 = vcmp.gt.f32.partialorder %v1609, 0.0
    %v1617 = vmul.f32 %v1443, 0.2
    %v1618 = vmul.f32 %v1445, 0.2
    %v1619 = vmul.f32 %v1607, 0.2
    %v1620 = vmul.f32 %v1609, 0.2
    %v1621 = vsel %vm1613, %v1443, %v1617
    %v1622 = vsel %vm1614, %v1445, %v1618
    %v1623 = vsel %vm1615, %v1607, %v1619
    %v1624 = vsel %vm1616, %v1609, %v1620
    %v1625 = vpack.c.bf16 %v1621, %v1621
    %v1626 = vpack.c.bf16 %v1622, %v1622
    %v1627 = vpack.c.bf16 %v1623, %v1623
    %v1628 = vpack.c.bf16 %v1624, %v1624
    %v1629 = vld [vmem:[#allocation8] sm:$0xff]
    %v1630 = vld [vmem:[#allocation8 + $0x8] sm:$0xff]
    %v1631 = vld [vmem:[#allocation8 + $0x10] sm:$0xff]
    %v1632 = vld [vmem:[#allocation8 + $0x18] sm:$0xff]
    %v1633 = vld [vmem:[#allocation8 + $0x20] sm:$0xff]
    %v1634 = vld [vmem:[#allocation8 + $0x28] sm:$0xff]
    %v1635 = vld [vmem:[#allocation8 + $0x30] sm:$0xff]
    %v1636 = vld [vmem:[#allocation8 + $0x38] sm:$0xff]
    %v1637 = vld [vmem:[#allocation8 + $0x40] sm:$0xff]
    %v1638 = vld [vmem:[#allocation8 + $0x48] sm:$0xff]
    %v1639 = vld [vmem:[#allocation8 + $0x50] sm:$0xff]
    %v1640 = vld [vmem:[#allocation8 + $0x58] sm:$0xff]
    %v1641 = vld [vmem:[#allocation8 + $0x60] sm:$0xff]
    %v1642 = vld [vmem:[#allocation8 + $0x68] sm:$0xff]
    %v1643 = vld [vmem:[#allocation8 + $0x70] sm:$0xff]
    %v1644 = vld [vmem:[#allocation8 + $0x78] sm:$0xff]
    %v1645 = vld [vmem:[#allocation8 + $0x80] sm:$0xff]
    %v1646 = vld [vmem:[#allocation8 + $0x88] sm:$0xff]
    %v1647 = vld [vmem:[#allocation8 + $0x90] sm:$0xff]
    %v1648 = vld [vmem:[#allocation8 + $0x98] sm:$0xff]
    %v1649 = vld [vmem:[#allocation8 + $0xa0] sm:$0xff]
    %v1650 = vld [vmem:[#allocation8 + $0xa8] sm:$0xff]
    %v1651 = vld [vmem:[#allocation8 + $0xb0] sm:$0xff]
    %v1652 = vld [vmem:[#allocation8 + $0xb8] sm:$0xff]
    %v1653 = vld [vmem:[#allocation8 + $0xc0] sm:$0xff]
    %v1654 = vld [vmem:[#allocation8 + $0xc8] sm:$0xff]
    %v1655 = vld [vmem:[#allocation8 + $0xd0] sm:$0xff]
    %v1656 = vld [vmem:[#allocation8 + $0xd8] sm:$0xff]
    %v1657 = vld [vmem:[#allocation8 + $0xe0] sm:$0xff]
    %v1658 = vld [vmem:[#allocation8 + $0xe8] sm:$0xff]
    %v1659 = vld [vmem:[#allocation8 + $0xf0] sm:$0xff]
    %v1660 = vld [vmem:[#allocation8 + $0xf8] sm:$0xff]
    %v1661 = vld [vmem:[#allocation8 + $0x100] sm:$0xff]
    %v1662 = vld [vmem:[#allocation8 + $0x108] sm:$0xff]
    %v1663 = vld [vmem:[#allocation8 + $0x110] sm:$0xff]
    %v1664 = vld [vmem:[#allocation8 + $0x118] sm:$0xff]
    %v1665 = vld [vmem:[#allocation8 + $0x120] sm:$0xff]
    %v1666 = vld [vmem:[#allocation8 + $0x128] sm:$0xff]
    %v1667 = vld [vmem:[#allocation8 + $0x130] sm:$0xff]
    %v1668 = vld [vmem:[#allocation8 + $0x138] sm:$0xff]
    %v1669 = vld [vmem:[#allocation8 + $0x140] sm:$0xff]
    %v1670 = vld [vmem:[#allocation8 + $0x148] sm:$0xff]
    %v1671 = vld [vmem:[#allocation8 + $0x150] sm:$0xff]
    %v1672 = vld [vmem:[#allocation8 + $0x158] sm:$0xff]
    %v1673 = vld [vmem:[#allocation8 + $0x160] sm:$0xff]
    %v1674 = vld [vmem:[#allocation8 + $0x168] sm:$0xff]
    %v1675 = vld [vmem:[#allocation8 + $0x170] sm:$0xff]
    %v1676 = vld [vmem:[#allocation8 + $0x178] sm:$0xff]
    %v1677 = vld [vmem:[#allocation8 + $0x180] sm:$0xff]
    %v1678 = vld [vmem:[#allocation8 + $0x188] sm:$0xff]
    %v1679 = vld [vmem:[#allocation8 + $0x190] sm:$0xff]
    %v1680 = vld [vmem:[#allocation8 + $0x198] sm:$0xff]
    %v1681 = vld [vmem:[#allocation8 + $0x1a0] sm:$0xff]
    %v1682 = vld [vmem:[#allocation8 + $0x1a8] sm:$0xff]
    %v1683 = vld [vmem:[#allocation8 + $0x1b0] sm:$0xff]
    %v1684 = vld [vmem:[#allocation8 + $0x1b8] sm:$0xff]
    %v1685 = vld [vmem:[#allocation8 + $0x1c0] sm:$0xff]
    %v1686 = vld [vmem:[#allocation8 + $0x1c8] sm:$0xff]
    %v1687 = vld [vmem:[#allocation8 + $0x1d0] sm:$0xff]
    %v1688 = vld [vmem:[#allocation8 + $0x1d8] sm:$0xff]
    %v1689 = vld [vmem:[#allocation8 + $0x1e0] sm:$0xff]
    %v1690 = vld [vmem:[#allocation8 + $0x1e8] sm:$0xff]
    %v1691 = vld [vmem:[#allocation8 + $0x1f0] sm:$0xff]
    %v1692 = vld [vmem:[#allocation8 + $0x1f8] sm:$0xff]
    %v1693 = vld [vmem:[%s4] sm:$0x3]
    %v1695 = vlaneseq
    %v1696 = vshrl.u32 %v1695, 7
    %v1697 = vsub.s32 0, %v1696
    %v1698 = vrot.slane %v1693, %v1697
    %v1699 = vlaneseq
    %v1700 = vshrl.u32 %v1699, 7
    %v1701 = vsub.s32 1, %v1700
    %v1702 = vrot.slane %v1693, %v1701
    %v1769 = vunpack.c.l.b16 %v1629
    %v1770 = vunpack.c.h.b16 %v1629
    %v1771 = vunpack.c.l.b16 %v1630
    %v1772 = vunpack.c.h.b16 %v1630
    %v1773 = vunpack.c.l.b16 %v1631
    %v1774 = vunpack.c.h.b16 %v1631
    %v1775 = vunpack.c.l.b16 %v1632
    %v1776 = vunpack.c.h.b16 %v1632
    %v1777 = vunpack.c.l.b16 %v1633
    %v1778 = vunpack.c.h.b16 %v1633
    %v1779 = vunpack.c.l.b16 %v1634
    %v1780 = vunpack.c.h.b16 %v1634
    %v1781 = vunpack.c.l.b16 %v1635
    %v1782 = vunpack.c.h.b16 %v1635
    %v1783 = vunpack.c.l.b16 %v1636
    %v1784 = vunpack.c.h.b16 %v1636
    %v1785 = vunpack.c.l.b16 %v1637
    %v1786 = vunpack.c.h.b16 %v1637
    %v1787 = vunpack.c.l.b16 %v1638
    %v1788 = vunpack.c.h.b16 %v1638
    %v1789 = vunpack.c.l.b16 %v1639
    %v1790 = vunpack.c.h.b16 %v1639
    %v1791 = vunpack.c.l.b16 %v1640
    %v1792 = vunpack.c.h.b16 %v1640
    %v1793 = vunpack.c.l.b16 %v1641
    %v1794 = vunpack.c.h.b16 %v1641
    %v1795 = vunpack.c.l.b16 %v1642
    %v1796 = vunpack.c.h.b16 %v1642
    %v1797 = vunpack.c.l.b16 %v1643
    %v1798 = vunpack.c.h.b16 %v1643
    %v1799 = vunpack.c.l.b16 %v1644
    %v1800 = vunpack.c.h.b16 %v1644
    %v1801 = vunpack.c.l.b16 %v1645
    %v1802 = vunpack.c.h.b16 %v1645
    %v1803 = vunpack.c.l.b16 %v1646
    %v1804 = vunpack.c.h.b16 %v1646
    %v1805 = vunpack.c.l.b16 %v1647
    %v1806 = vunpack.c.h.b16 %v1647
    %v1807 = vunpack.c.l.b16 %v1648
    %v1808 = vunpack.c.h.b16 %v1648
    %v1809 = vunpack.c.l.b16 %v1649
    %v1810 = vunpack.c.h.b16 %v1649
    %v1811 = vunpack.c.l.b16 %v1650
    %v1812 = vunpack.c.h.b16 %v1650
    %v1813 = vunpack.c.l.b16 %v1651
    %v1814 = vunpack.c.h.b16 %v1651
    %v1815 = vunpack.c.l.b16 %v1652
    %v1816 = vunpack.c.h.b16 %v1652
    %v1817 = vunpack.c.l.b16 %v1653
    %v1818 = vunpack.c.h.b16 %v1653
    %v1819 = vunpack.c.l.b16 %v1654
    %v1820 = vunpack.c.h.b16 %v1654
    %v1821 = vunpack.c.l.b16 %v1655
    %v1822 = vunpack.c.h.b16 %v1655
    %v1823 = vunpack.c.l.b16 %v1656
    %v1824 = vunpack.c.h.b16 %v1656
    %v1825 = vunpack.c.l.b16 %v1657
    %v1826 = vunpack.c.h.b16 %v1657
    %v1827 = vunpack.c.l.b16 %v1658
    %v1828 = vunpack.c.h.b16 %v1658
    %v1829 = vunpack.c.l.b16 %v1659
    %v1830 = vunpack.c.h.b16 %v1659
    %v1831 = vunpack.c.l.b16 %v1660
    %v1832 = vunpack.c.h.b16 %v1660
    %v1833 = vunpack.c.l.b16 %v1661
    %v1834 = vunpack.c.h.b16 %v1661
    %v1835 = vunpack.c.l.b16 %v1662
    %v1836 = vunpack.c.h.b16 %v1662
    %v1837 = vunpack.c.l.b16 %v1663
    %v1838 = vunpack.c.h.b16 %v1663
    %v1839 = vunpack.c.l.b16 %v1664
    %v1840 = vunpack.c.h.b16 %v1664
    %v1841 = vunpack.c.l.b16 %v1665
    %v1842 = vunpack.c.h.b16 %v1665
    %v1843 = vunpack.c.l.b16 %v1666
    %v1844 = vunpack.c.h.b16 %v1666
    %v1845 = vunpack.c.l.b16 %v1667
    %v1846 = vunpack.c.h.b16 %v1667
    %v1847 = vunpack.c.l.b16 %v1668
    %v1848 = vunpack.c.h.b16 %v1668
    %v1849 = vunpack.c.l.b16 %v1669
    %v1850 = vunpack.c.h.b16 %v1669
    %v1851 = vunpack.c.l.b16 %v1670
    %v1852 = vunpack.c.h.b16 %v1670
    %v1853 = vunpack.c.l.b16 %v1671
    %v1854 = vunpack.c.h.b16 %v1671
    %v1855 = vunpack.c.l.b16 %v1672
    %v1856 = vunpack.c.h.b16 %v1672
    %v1857 = vunpack.c.l.b16 %v1673
    %v1858 = vunpack.c.h.b16 %v1673
    %v1859 = vunpack.c.l.b16 %v1674
    %v1860 = vunpack.c.h.b16 %v1674
    %v1861 = vunpack.c.l.b16 %v1675
    %v1862 = vunpack.c.h.b16 %v1675
    %v1863 = vunpack.c.l.b16 %v1676
    %v1864 = vunpack.c.h.b16 %v1676
    %v1865 = vunpack.c.l.b16 %v1677
    %v1866 = vunpack.c.h.b16 %v1677
    %v1867 = vunpack.c.l.b16 %v1678
    %v1868 = vunpack.c.h.b16 %v1678
    %v1869 = vunpack.c.l.b16 %v1679
    %v1870 = vunpack.c.h.b16 %v1679
    %v1871 = vunpack.c.l.b16 %v1680
    %v1872 = vunpack.c.h.b16 %v1680
    %v1873 = vunpack.c.l.b16 %v1681
    %v1874 = vunpack.c.h.b16 %v1681
    %v1875 = vunpack.c.l.b16 %v1682
    %v1876 = vunpack.c.h.b16 %v1682
    %v1877 = vunpack.c.l.b16 %v1683
    %v1878 = vunpack.c.h.b16 %v1683
    %v1879 = vunpack.c.l.b16 %v1684
    %v1880 = vunpack.c.h.b16 %v1684
    %v1881 = vunpack.c.l.b16 %v1685
    %v1882 = vunpack.c.h.b16 %v1685
    %v1883 = vunpack.c.l.b16 %v1686
    %v1884 = vunpack.c.h.b16 %v1686
    %v1885 = vunpack.c.l.b16 %v1687
    %v1886 = vunpack.c.h.b16 %v1687
    %v1887 = vunpack.c.l.b16 %v1688
    %v1888 = vunpack.c.h.b16 %v1688
    %v1889 = vunpack.c.l.b16 %v1689
    %v1890 = vunpack.c.h.b16 %v1689
    %v1891 = vunpack.c.l.b16 %v1690
    %v1892 = vunpack.c.h.b16 %v1690
    %v1893 = vunpack.c.l.b16 %v1691
    %v1894 = vunpack.c.h.b16 %v1691
    %v1895 = vunpack.c.l.b16 %v1692
    %v1896 = vunpack.c.h.b16 %v1692
    %v1897 = vpack.c.b16 %v1771, %v1769
    %v1898 = vpack.c.b16 %v1772, %v1770
    %v1899 = vpack.c.b16 %v1775, %v1773
    %v1900 = vpack.c.b16 %v1776, %v1774
    %v1901 = vpack.c.b16 %v1779, %v1777
    %v1902 = vpack.c.b16 %v1780, %v1778
    %v1903 = vpack.c.b16 %v1783, %v1781
    %v1904 = vpack.c.b16 %v1784, %v1782
    %v1905 = vpack.c.b16 %v1787, %v1785
    %v1906 = vpack.c.b16 %v1788, %v1786
    %v1907 = vpack.c.b16 %v1791, %v1789
    %v1908 = vpack.c.b16 %v1792, %v1790
    %v1909 = vpack.c.b16 %v1795, %v1793
    %v1910 = vpack.c.b16 %v1796, %v1794
    %v1911 = vpack.c.b16 %v1799, %v1797
    %v1912 = vpack.c.b16 %v1800, %v1798
    %v1913 = vpack.c.b16 %v1803, %v1801
    %v1914 = vpack.c.b16 %v1804, %v1802
    %v1915 = vpack.c.b16 %v1807, %v1805
    %v1916 = vpack.c.b16 %v1808, %v1806
    %v1917 = vpack.c.b16 %v1811, %v1809
    %v1918 = vpack.c.b16 %v1812, %v1810
    %v1919 = vpack.c.b16 %v1815, %v1813
    %v1920 = vpack.c.b16 %v1816, %v1814
    %v1921 = vpack.c.b16 %v1819, %v1817
    %v1922 = vpack.c.b16 %v1820, %v1818
    %v1923 = vpack.c.b16 %v1823, %v1821
    %v1924 = vpack.c.b16 %v1824, %v1822
    %v1925 = vpack.c.b16 %v1827, %v1825
    %v1926 = vpack.c.b16 %v1828, %v1826
    %v1927 = vpack.c.b16 %v1831, %v1829
    %v1928 = vpack.c.b16 %v1832, %v1830
    %v1929 = vpack.c.b16 %v1835, %v1833
    %v1930 = vpack.c.b16 %v1836, %v1834
    %v1931 = vpack.c.b16 %v1839, %v1837
    %v1932 = vpack.c.b16 %v1840, %v1838
    %v1933 = vpack.c.b16 %v1843, %v1841
    %v1934 = vpack.c.b16 %v1844, %v1842
    %v1935 = vpack.c.b16 %v1847, %v1845
    %v1936 = vpack.c.b16 %v1848, %v1846
    %v1937 = vpack.c.b16 %v1851, %v1849
    %v1938 = vpack.c.b16 %v1852, %v1850
    %v1939 = vpack.c.b16 %v1855, %v1853
    %v1940 = vpack.c.b16 %v1856, %v1854
    %v1941 = vpack.c.b16 %v1859, %v1857
    %v1942 = vpack.c.b16 %v1860, %v1858
    %v1943 = vpack.c.b16 %v1863, %v1861
    %v1944 = vpack.c.b16 %v1864, %v1862
    %v1945 = vpack.c.b16 %v1867, %v1865
    %v1946 = vpack.c.b16 %v1868, %v1866
    %v1947 = vpack.c.b16 %v1871, %v1869
    %v1948 = vpack.c.b16 %v1872, %v1870
    %v1949 = vpack.c.b16 %v1875, %v1873
    %v1950 = vpack.c.b16 %v1876, %v1874
    %v1951 = vpack.c.b16 %v1879, %v1877
    %v1952 = vpack.c.b16 %v1880, %v1878
    %v1953 = vpack.c.b16 %v1883, %v1881
    %v1954 = vpack.c.b16 %v1884, %v1882
    %v1955 = vpack.c.b16 %v1887, %v1885
    %v1956 = vpack.c.b16 %v1888, %v1886
    %v1957 = vpack.c.b16 %v1891, %v1889
    %v1958 = vpack.c.b16 %v1892, %v1890
    %v1959 = vpack.c.b16 %v1895, %v1893
    %v1960 = vpack.c.b16 %v1896, %v1894
    %2025 = vmatprep.subr.bf16.mxu0 %v1912
    %2026 = vmatpush1.bf16.msra.mxu0 %v1911
    %2027 = vmatprep.subr.bf16.mxu0 %v1910
    %2028 = vmatpush1.bf16.msra.mxu0 %v1909
    %2029 = vmatprep.subr.bf16.mxu0 %v1908
    %2030 = vmatpush1.bf16.msra.mxu0 %v1907
    %2031 = vmatprep.subr.bf16.mxu0 %v1906
    %2032 = vmatpush1.bf16.msra.mxu0 %v1905
    %2033 = vmatprep.subr.bf16.mxu0 %v1904
    %2034 = vmatpush1.bf16.msra.mxu0 %v1903
    %2035 = vmatprep.subr.bf16.mxu0 %v1902
    %2036 = vmatpush1.bf16.msra.mxu0 %v1901
    %2037 = vmatprep.subr.bf16.mxu0 %v1900
    %2038 = vmatpush1.bf16.msra.mxu0 %v1899
    %2039 = vmatprep.subr.bf16.mxu0 %v1898
    %2040 = vmatpush1.bf16.msra.mxu0 %v1897
    %2041 = vmatprep.subr.bf16.mxu0 %v1928
    %2042 = vmatpush2.bf16.msra.mxu0 %v1927
    %2043 = vmatprep.subr.bf16.mxu0 %v1926
    %2044 = vmatpush2.bf16.msra.mxu0 %v1925
    %2045 = vmatprep.subr.bf16.mxu0 %v1924
    %2046 = vmatpush2.bf16.msra.mxu0 %v1923
    %2047 = vmatprep.subr.bf16.mxu0 %v1922
    %2048 = vmatpush2.bf16.msra.mxu0 %v1921
    %2049 = vmatprep.subr.bf16.mxu0 %v1920
    %2050 = vmatpush2.bf16.msra.mxu0 %v1919
    %2051 = vmatprep.subr.bf16.mxu0 %v1918
    %2052 = vmatpush2.bf16.msra.mxu0 %v1917
    %2053 = vmatprep.subr.bf16.mxu0 %v1916
    %2054 = vmatpush2.bf16.msra.mxu0 %v1915
    %2055 = vmatprep.subr.bf16.mxu0 %v1914
    %2056 = vmatpush2.bf16.msra.mxu0 %v1913
    %2057 = vmatprep.mubr.bf16.mxu0 %v1626
    %2058 = vmatmul.mubr.bf16.gmra.mxu0 %v1625
    %v2059 = vpop.f32.mrf.mxu0
    %v2060 = vadd.f32 %v1698, %v2059
    %v2061 = vpop.f32.mrf.mxu0
    %v2062 = vadd.f32 %v1702, %v2061
    %v2063 = vpop.f32.mrf.mxu0
    %v2064 = vpop.f32.mrf.mxu0
    %2065 = vdwg.mxu0
    %2066 = vmatprep.subr.bf16.mxu0 %v1944
    %2067 = vmatpush1.bf16.msra.mxu0 %v1943
    %2068 = vmatprep.subr.bf16.mxu0 %v1942
    %2069 = vmatpush1.bf16.msra.mxu0 %v1941
    %2070 = vmatprep.subr.bf16.mxu0 %v1940
    %2071 = vmatpush1.bf16.msra.mxu0 %v1939
    %2072 = vmatprep.subr.bf16.mxu0 %v1938
    %2073 = vmatpush1.bf16.msra.mxu0 %v1937
    %2074 = vmatprep.subr.bf16.mxu0 %v1936
    %2075 = vmatpush1.bf16.msra.mxu0 %v1935
    %2076 = vmatprep.subr.bf16.mxu0 %v1934
    %2077 = vmatpush1.bf16.msra.mxu0 %v1933
    %2078 = vmatprep.subr.bf16.mxu0 %v1932
    %2079 = vmatpush1.bf16.msra.mxu0 %v1931
    %2080 = vmatprep.subr.bf16.mxu0 %v1930
    %2081 = vmatpush1.bf16.msra.mxu0 %v1929
    %2082 = vmatprep.subr.bf16.mxu0 %v1960
    %2083 = vmatpush2.bf16.msra.mxu0 %v1959
    %2084 = vmatprep.subr.bf16.mxu0 %v1958
    %2085 = vmatpush2.bf16.msra.mxu0 %v1957
    %2086 = vmatprep.subr.bf16.mxu0 %v1956
    %2087 = vmatpush2.bf16.msra.mxu0 %v1955
    %2088 = vmatprep.subr.bf16.mxu0 %v1954
    %2089 = vmatpush2.bf16.msra.mxu0 %v1953
    %2090 = vmatprep.subr.bf16.mxu0 %v1952
    %2091 = vmatpush2.bf16.msra.mxu0 %v1951
    %2092 = vmatprep.subr.bf16.mxu0 %v1950
    %2093 = vmatpush2.bf16.msra.mxu0 %v1949
    %2094 = vmatprep.subr.bf16.mxu0 %v1948
    %2095 = vmatpush2.bf16.msra.mxu0 %v1947
    %2096 = vmatprep.subr.bf16.mxu0 %v1946
    %2097 = vmatpush2.bf16.msra.mxu0 %v1945
    %2098 = vmatprep.mubr.bf16.mxu0 %v1628
    %2099 = vmatmul.mubr.bf16.gmra.mxu0 %v1627
    %v2100 = vpop.f32.mrf.mxu0
    %v2101 = vadd.f32 %v2060, %v2100
    %v2102 = vpop.f32.mrf.mxu0
    %v2103 = vadd.f32 %v2062, %v2102
    %v2104 = vpop.f32.mrf.mxu0
    %v2105 = vpop.f32.mrf.mxu0
    %2106 = vdwg.mxu0
    %vm2107 = vcmp.gt.f32.partialorder %v2101, 0.0
    %vm2108 = vcmp.gt.f32.partialorder %v2103, 0.0
    %v2109 = vmul.f32 %v2101, 0.2
    %v2110 = vmul.f32 %v2103, 0.2
    %v2111 = vsel %vm2107, %v2101, %v2109
    %v2112 = vsel %vm2108, %v2103, %v2110
    %v2113 = vld [vmem:[%s5] sm:$0x3]
    %v2114 = vld [vmem:[#allocation2] sm:$0x1]
    %2116 = vset.pattern.permute.xlu0 0
    %2117 = vperm.xlu0 %2116, %v2114
    %v2118 = vpop.permute.xlu0 %2117
    %v2120 = vlaneseq
    %v2121 = vshrl.u32 %v2120, 7
    %v2122 = vsub.s32 0, %v2121
    %v2123 = vrot.slane %v2118, %v2122
    %v2125 = vlaneseq
    %v2126 = vshrl.u32 %v2125, 7
    %v2127 = vsub.s32 0, %v2126
    %v2128 = vrot.slane %v2113, %v2127
    %v2129 = vlaneseq
    %v2130 = vshrl.u32 %v2129, 7
    %v2131 = vsub.s32 1, %v2130
    %v2132 = vrot.slane %v2113, %v2131
    %2135 = vmatprep.subr.mxu0 0.0
    %2136 = vmatpush1.xpose.msra.mxu0 0.0
    %2137 = vmatprep.subr.mxu0 0.0
    %2138 = vmatpush1.xpose.msra.mxu0 0.0
    %2139 = vmatprep.subr.mxu0 0.0
    %2140 = vmatpush1.xpose.msra.mxu0 0.0
    %2141 = vmatprep.subr.mxu0 0.0
    %2142 = vmatpush1.xpose.msra.mxu0 0.0
    %2143 = vmatprep.subr.mxu0 0.0
    %2144 = vmatpush1.xpose.msra.mxu0 0.0
    %2145 = vmatprep.subr.mxu0 0.0
    %2146 = vmatpush1.xpose.msra.mxu0 0.0
    %2147 = vmatprep.subr.mxu0 0.0
    %2148 = vmatpush1.xpose.msra.mxu0 0.0
    %2149 = vmatprep.subr.mxu0 0.0
    %2150 = vmatpush1.xpose.msra.mxu0 0.0
    %2151 = vmatprep.subr.mxu0 0.0
    %2152 = vmatpush1.xpose.msra.mxu0 0.0
    %2153 = vmatprep.subr.mxu0 0.0
    %2154 = vmatpush1.xpose.msra.mxu0 0.0
    %2155 = vmatprep.subr.mxu0 0.0
    %2156 = vmatpush1.xpose.msra.mxu0 0.0
    %2157 = vmatprep.subr.mxu0 0.0
    %2158 = vmatpush1.xpose.msra.mxu0 0.0
    %2159 = vmatprep.subr.mxu0 0.0
    %2160 = vmatpush1.xpose.msra.mxu0 0.0
    %2161 = vmatprep.subr.mxu0 0.0
    %2162 = vmatpush1.xpose.msra.mxu0 0.0
    %2163 = vmatprep.subr.mxu0 0.0
    %2164 = vmatpush1.xpose.msra.mxu0 0.0
    %2165 = vmatprep.subr.mxu0 %v2112
    %2166 = vmatpush1.xpose.msra.mxu0 %v2111
    %2167 = vmatprep.subr.mxu0 0.0
    %2168 = vmatpush2.xpose.msra.mxu0 0.0
    %2169 = vmatprep.subr.mxu0 0.0
    %2170 = vmatpush2.xpose.msra.mxu0 0.0
    %2171 = vmatprep.subr.mxu0 0.0
    %2172 = vmatpush2.xpose.msra.mxu0 0.0
    %2173 = vmatprep.subr.mxu0 0.0
    %2174 = vmatpush2.xpose.msra.mxu0 0.0
    %2175 = vmatprep.subr.mxu0 0.0
    %2176 = vmatpush2.xpose.msra.mxu0 0.0
    %2177 = vmatprep.subr.mxu0 0.0
    %2178 = vmatpush2.xpose.msra.mxu0 0.0
    %2179 = vmatprep.subr.mxu0 0.0
    %2180 = vmatpush2.xpose.msra.mxu0 0.0
    %2181 = vmatprep.subr.mxu0 0.0
    %2182 = vmatpush2.xpose.msra.mxu0 0.0
    %2183 = vmatprep.subr.mxu0 0.0
    %2184 = vmatpush2.xpose.msra.mxu0 0.0
    %2185 = vmatprep.subr.mxu0 0.0
    %2186 = vmatpush2.xpose.msra.mxu0 0.0
    %2187 = vmatprep.subr.mxu0 0.0
    %2188 = vmatpush2.xpose.msra.mxu0 0.0
    %2189 = vmatprep.subr.mxu0 0.0
    %2190 = vmatpush2.xpose.msra.mxu0 0.0
    %2191 = vmatprep.subr.mxu0 0.0
    %2192 = vmatpush2.xpose.msra.mxu0 0.0
    %2193 = vmatprep.subr.mxu0 0.0
    %2194 = vmatpush2.xpose.msra.mxu0 0.0
    %2195 = vmatprep.subr.mxu0 0.0
    %2196 = vmatpush2.xpose.msra.mxu0 0.0
    %2197 = vmatprep.subr.mxu0 0.0
    %2198 = vmatpush2.xpose.msra.mxu0 0.0
    %2199 = vmatprep.mubr.f32.mxu0 %v2132
    %2200 = vmatmul.mubr.f32.gmra.mxu0 %v2128
    %v2201 = vpop.f32.mrf.mxu0
    %v2202 = vadd.f32 %v2123, %v2201
    %v2203 = vpop.f32.mrf.mxu0
    %2204 = vdwg.mxu0
    %v2205 = vxor.u32 %v2202, 2147483648
    %v2206 = vmul.f32 %v2205, 1.442695
    %v2207 = vpow.pop %v2206
    %v2208 = vadd.f32 %v2207, 1.0
    %v2209 = vrcp.pop %v2208
    %v2210 = vmul.f32 1.0, %v2209
    %vm2211 = vcmask 57344
    %2212 = vst.msk [vmem:[#allocation9] sm:$0x1] %vm2211, %v2210
    // Predicated region
    $region42: #{tpu_custom_call.1} parent=1 // pred_check
      _
    $region43: #{tpu_custom_call.1} parent=1 // pred_check_branch
      %2214 = sbr.rel (0) target = $region45
    $region44: #{tpu_custom_call.1} parent=1 // pred_region
      %s2216 = ssub.s32 16, 16
      %2217 = vsyncadd [#allocation5], %s2216
      %s2219 = sshll.u32 [#allocation9], 4
      %s2220 = int_to_ptr.vmem [resolvable:$true] %s2219
      %2222 = dma.vmem_to_hbm [thread:$0]  %s2220, 16, %s7, [#allocation5]
    $region45: #{tpu_custom_call.1} parent=1 // pred_fallthru
      _
    // Predicated region
    $region46: #{tpu_custom_call.1} parent=1 // pred_check
      _
    $region47: #{tpu_custom_call.1} parent=1 // pred_check_branch
      %2224 = sbr.rel (0) target = $region49
    $region48: #{tpu_custom_call.1} parent=1 // pred_region
      %2225 = dma.done [#allocation5], 16
    $region49: #{tpu_custom_call.1} parent=1 // pred_fallthru
      _
    %2226 = vsyncpa [#allocation4], 1
    %2227 = vsyncpa [#allocation7], 1
    %2228 = vsyncpa [#allocation5], 1

</llo_original>
